<compile_context>
chip_gen: v5e
topology: v5e:2x2
jax: 0.10.0
libtpu: 0.0.40
codegen_flags: <defaults>
</compile_context>

<pallas_src>
import functools

import jax
import jax.numpy as jnp
from jax.experimental import pallas as pl
from jax.experimental.pallas import tpu as pltpu

LANE = 128      # lane width: pad all feature axes to a multiple of this
SUBLANE = 8     # f32 sublane width: pad / tile the batch axis to a multiple of this


def _round_up(n, m):
    return ((n + m - 1) // m) * m


def _leaky_relu(v, slope=0.2):
    return jnp.where(v > 0, v, slope * v)


def _vmem_budget_bytes():
    """Generation-aware VMEM budget: physical capacity minus compiler headroom,
    capped at ~100 MiB (so 128 MiB parts get ~100 MiB, v7x's 64 MiB gets ~48 MiB)."""
    cap = 64 * 1024 * 1024
    try:
        info = pltpu.get_tpu_info()
        cap = int(getattr(info, "vmem_capacity_bytes", cap))
    except Exception:
        pass
    return int(min(100 * 1024 * 1024,
                   max(16 * 1024 * 1024, cap - 16 * 1024 * 1024)))


# -----------------------------------------------------------------------------
# Kernel
# -----------------------------------------------------------------------------
def gen_mlp_skip_kernel(
    x_ref,        # [TB, In_p]                 f32
    w_in_ref,     # [In_p, H_p]                bf16 (resident)
    b_in_ref,     # [1, H_p]                   f32  (resident)
    w1_ref,       # [L or 1, H_p, H_p]         bf16 (resident stack or streamed block)
    b1_ref,       # [L or 1, 1, H_p]           f32
    w2_ref,       # [L or 1, H_p, H_p]         bf16
    b2_ref,       # [L or 1, 1, H_p]           f32
    w_out_ref,    # [H_p, Out_p]               bf16 (resident)
    b_out_ref,    # [1, Out_p]                 f32  (resident)
    o_ref,        # [TB, Out_p]                f32  (resident across the L axis)
    h_ref,        # VMEM scratch [TB, H_p] f32 : running activation
    *,
    blocks_resident: bool,
):
    l = pl.program_id(1)
    last = pl.num_programs(1) - 1
    # Resident stack: index block l directly; streamed: leading dim is 1.
    bi = l if blocks_resident else 0

    # ---- input layer + tanh : only on the first residual-block step ----------
    @pl.when(l == 0)
    def _():
        h_ref[...] = jnp.tanh(
            jnp.dot(x_ref[...].astype(w_in_ref.dtype), w_in_ref[...],
                    preferred_element_type=jnp.float32)
            + b_in_ref[...]
        )

    # ---- residual block l -----------------------------------------------------
    h_prev = h_ref[...]                                           # f32 [TB, H_p]
    t = _leaky_relu(
        jnp.dot(h_prev.astype(w1_ref.dtype), w1_ref[bi],
                preferred_element_type=jnp.float32)
        + b1_ref[bi]
    )
    t = (
        jnp.dot(t.astype(w2_ref.dtype), w2_ref[bi],
                preferred_element_type=jnp.float32)
        + b2_ref[bi]
    )
    h_new = _leaky_relu(t + h_prev)
    h_ref[...] = h_new

    # ---- output layer (no activation) : only on the last step -----------------
    @pl.when(l == last)
    def _():
        # Use the just-computed activation value (still in vregs) instead of
        # re-reading h_ref: avoids an extra [TB,H_p] load before the last matmul.
        o_ref[...] = (
            jnp.dot(h_new.astype(w_out_ref.dtype), w_out_ref[...],
                    preferred_element_type=jnp.float32)
            + b_out_ref[...]
        ).astype(o_ref.dtype)


# -----------------------------------------------------------------------------
# Parameter preparation (done ONCE, hoisted out of the per-call path)
# -----------------------------------------------------------------------------
def prepare_params(params, weight_dtype=jnp.bfloat16):
    """Pad all feature axes to multiples of 128 (lane-dense matmuls / stores) and
    cast weights to `weight_dtype` once. Call this once at init and reuse."""
    w_in, b_in = params["w_in"], params["b_in"]
    w1, b1 = params["w1"], params["b1"]
    w2, b2 = params["w2"], params["b2"]
    w_out, b_out = params["w_out"], params["b_out"]

    In, H = w_in.shape
    Out = w_out.shape[1]
    L = w1.shape[0]
    In_p, H_p, Out_p = (_round_up(d, LANE) for d in (In, H, Out))
    f32 = jnp.float32

    return {
        "w_in": jnp.pad(w_in, ((0, In_p - In), (0, H_p - H))).astype(weight_dtype),
        "b_in": jnp.pad(b_in, ((0, 0), (0, H_p - H))).astype(f32),
        "w1": jnp.pad(w1, ((0, 0), (0, H_p - H), (0, H_p - H))).astype(weight_dtype),
        "b1": jnp.pad(b1, ((0, 0), (0, 0), (0, H_p - H))).astype(f32),
        "w2": jnp.pad(w2, ((0, 0), (0, H_p - H), (0, H_p - H))).astype(weight_dtype),
        "b2": jnp.pad(b2, ((0, 0), (0, 0), (0, H_p - H))).astype(f32),
        "w_out": jnp.pad(w_out, ((0, H_p - H), (0, Out_p - Out))).astype(weight_dtype),
        "b_out": jnp.pad(b_out, ((0, 0), (0, Out_p - Out))).astype(f32),
        "_meta": dict(In=In, H=H, Out=Out, L=L, In_p=In_p, H_p=H_p, Out_p=Out_p,
                      weight_dtype=jnp.dtype(weight_dtype)),
    }


# -----------------------------------------------------------------------------
# Forward wrapper
# -----------------------------------------------------------------------------
def generater_mlp_skip(x, params, *, weight_dtype=jnp.bfloat16, batch_tile=512):
    """x: [B, input_size] float32.  params: raw init_params() dict or the output
    of prepare_params() (preferred for repeated inference calls)."""
    if "_meta" not in params:
        # One-off convenience path; repeated callers should prepare_params() once.
        params = prepare_params(params, weight_dtype)

    meta = params["_meta"]
    In, H, Out, L = meta["In"], meta["H"], meta["Out"], meta["L"]
    In_p, H_p, Out_p = meta["In_p"], meta["H_p"], meta["Out_p"]
    wdtype = meta["weight_dtype"]
    wbytes = wdtype.itemsize

    assert L >= 1, "need at least one residual block (grid axis over L)"
    B, In_x = x.shape
    assert In_x == In, f"input feature mismatch: {In_x} vs {In}"

    # ---- batch tiling: big tiles for arithmetic intensity, but >= 2 tiles when
    #      B allows so the parallel axis can be megacore-sharded on v7x. --------
    if B <= SUBLANE:
        tb = _round_up(max(B, 1), SUBLANE)
    else:
        tb = max(SUBLANE, min(batch_tile, _round_up(pl.cdiv(B, 2), SUBLANE)))
    B_p = _round_up(B, tb)
    nb = B_p // tb

    xp = jnp.pad(x.astype(jnp.float32), ((0, B_p - B), (0, In_p - In)))

    # ---- VMEM budget & residual-weight residency decision ----------------------
    # (conservatively assume every BlockSpec is double-buffered, even at a
    #  constant index, so the non-Buffered fallback also fits.)
    vmem_budget = _vmem_budget_bytes()
    blk_stack = L * (2 * H_p * H_p * wbytes + 2 * H_p * 4)      # full fc1/fc2 stacks (+bias)
    blk_stream = 2 * (2 * H_p * H_p * wbytes + 2 * H_p * 4)     # one double-buffered block
    fixed = (
        2 * ((In_p * H_p + H_p * Out_p) * wbytes + (H_p + Out_p) * 4)  # in/out layers (x2 bufs)
        + 2 * tb * In_p * 4                                            # x double buffer
        + 2 * tb * Out_p * 4                                           # output double buffer
        + tb * H_p * 4                                                 # h scratch
    )
    blocks_resident = (fixed + 2 * blk_stack) <= vmem_budget
    vmem_est = fixed + (2 * blk_stack if blocks_resident else blk_stream)
    vmem_limit = int(min(vmem_budget, max(16 * 1024 * 1024, 2 * vmem_est)))

    # ---- advisory cost estimate (actual HBM traffic incl. streaming factor) ----
    flops = 2 * B_p * (In_p * H_p + 2 * L * H_p * H_p + H_p * Out_p)
    w_stream_factor = 1 if blocks_resident else nb
    bytes_accessed = (
        (In_p * H_p + H_p * Out_p) * wbytes + (H_p + Out_p) * 4
        + w_stream_factor * L * (2 * H_p * H_p * wbytes + 2 * H_p * 4)
        + (B_p * In_p + B_p * Out_p) * 4
    )
    cost = pl.CostEstimate(flops=int(flops), transcendentals=int(B_p * H_p),
                           bytes_accessed=int(bytes_accessed))

    # ---- block specs -----------------------------------------------------------
    if blocks_resident:
        w_blk_shape, b_blk_shape = (L, H_p, H_p), (L, 1, H_p)
        w_blk_map = lambda b, l: (0, 0, 0)          # fetched once for whole grid
    else:
        w_blk_shape, b_blk_shape = (1, H_p, H_p), (1, 1, H_p)
        w_blk_map = lambda b, l: (l, 0, 0)          # streamed / double-buffered

    kernel = functools.partial(gen_mlp_skip_kernel, blocks_resident=blocks_resident)

    def build(single_buffer_resident):
        def const_spec(shape, imap):
            # constant-index block: one buffer is enough (saves VMEM, esp. v7x)
            if single_buffer_resident:
                return pl.BlockSpec(shape, imap, pipeline_mode=pl.Buffered(1))
            return pl.BlockSpec(shape, imap)

        blk_spec = const_spec if blocks_resident else (lambda s, m: pl.BlockSpec(s, m))

        grid_spec = pltpu.PrefetchScalarGridSpec(
            num_scalar_prefetch=0,
            grid=(nb, L),                                        # (batch tile, residual block)
            in_specs=[
                pl.BlockSpec((tb, In_p), lambda b, l: (b, 0)),   # x (per batch tile)
                const_spec((In_p, H_p), lambda b, l: (0, 0)),    # w_in   (resident)
                const_spec((1, H_p), lambda b, l: (0, 0)),       # b_in   (resident)
                blk_spec(w_blk_shape, w_blk_map),                # w1
                blk_spec(b_blk_shape, w_blk_map),                # b1
                blk_spec(w_blk_shape, w_blk_map),                # w2
                blk_spec(b_blk_shape, w_blk_map),                # b2
                const_spec((H_p, Out_p), lambda b, l: (0, 0)),   # w_out  (resident)
                const_spec((1, Out_p), lambda b, l: (0, 0)),     # b_out  (resident)
            ],
            out_specs=pl.BlockSpec((tb, Out_p), lambda b, l: (b, 0)),
            scratch_shapes=[pltpu.VMEM((tb, H_p), jnp.float32)],
        )
        return pl.pallas_call(
            kernel,
            out_shape=jax.ShapeDtypeStruct((B_p, Out_p), jnp.float32),
            grid_spec=grid_spec,
            compiler_params=pltpu.CompilerParams(
                dimension_semantics=("parallel", "arbitrary"),
                vmem_limit_bytes=vmem_limit,
            ),
            cost_estimate=cost,
        )

    args = (xp, params["w_in"], params["b_in"], params["w1"], params["b1"],
            params["w2"], params["b2"], params["w_out"], params["b_out"])

    try:
        out_p = build(single_buffer_resident=True)(*args)
    except Exception:
        # pipeline_mode=pl.Buffered(1) not supported here: fall back to default
        # double-buffering (correctness unaffected; fits the factor-2 budget).
        out_p = build(single_buffer_resident=False)(*args)

    return out_p[:B, :Out]


# -----------------------------------------------------------------------------
# Params / reference
# -----------------------------------------------------------------------------
def init_params(key, input_size, hidden_size, output_size, num_residual_blocks):
    """Synthetic init matching weights_init_normal: W ~ N(0, 0.03), b = 0.
    Weights stored as [in_features, out_features] so y = x @ W + b."""
    ks = jax.random.split(key, 4)
    std = 0.03
    return {
        "w_in": std * jax.random.normal(ks[0], (input_size, hidden_size), jnp.float32),
        "b_in": jnp.zeros((1, hidden_size), jnp.float32),
        "w1": std * jax.random.normal(
            ks[1], (num_residual_blocks, hidden_size, hidden_size), jnp.float32),
        "b1": jnp.zeros((num_residual_blocks, 1, hidden_size), jnp.float32),
        "w2": std * jax.random.normal(
            ks[2], (num_residual_blocks, hidden_size, hidden_size), jnp.float32),
        "b2": jnp.zeros((num_residual_blocks, 1, hidden_size), jnp.float32),
        "w_out": std * jax.random.normal(
            ks[3], (hidden_size, output_size), jnp.float32),
        "b_out": jnp.zeros((1, output_size), jnp.float32),
    }


def reference_forward(x, params, weight_dtype=jnp.bfloat16):
    """Pure-JAX reference with the same bf16-weight / f32-accumulate numerics."""
    def mm(a, w):
        return jnp.dot(a.astype(weight_dtype), w.astype(weight_dtype),
                       preferred_element_type=jnp.float32)

    h = jnp.tanh(mm(x, params["w_in"]) + params["b_in"])
    for l in range(params["w1"].shape[0]):
        res = h
        t = _leaky_relu(mm(h, params["w1"][l]) + params["b1"][l])
        t = mm(t, params["w2"][l]) + params["b2"][l]
        h = _leaky_relu(t + res)
    return mm(h, params["w_out"]) + params["b_out"]


if __name__ == "__main__":
    # Small shapes consistent with the module's forward (x: [batch, input_size]).
    batch = 8
    input_size = 16
    hidden_size = 32
    output_size = 8
    num_residual_blocks = 2

    key = jax.random.PRNGKey(0)
    k_x, k_p = jax.random.split(key)
    x = jax.random.normal(k_x, (batch, input_size), jnp.float32)
    raw_params = init_params(k_p, input_size, hidden_size, output_size,
                             num_residual_blocks)

    # Pad + cast once (hoisted out of the per-call path), then run the kernel.
    prepared = prepare_params(raw_params, weight_dtype=jnp.bfloat16)
    out = generater_mlp_skip(x, prepared)
    out = jax.block_until_ready(out)

    ref = reference_forward(x, raw_params)
    assert out.shape == (batch, output_size)
    # bf16 weights -> loosen the tolerance vs. an f32-only check.
    assert jnp.allclose(out, ref, atol=1e-2, rtol=1e-2), float(
        jnp.max(jnp.abs(out - ref)))

    print("KERNEL_OK")
</pallas_src>

<mosaic_0001>
module attributes {stable_mosaic.version = 11 : i64} {
  func.func @gen_mlp_skip_kernel(%arg0: i32, %arg1: i32, %arg2: memref<8x128xf32, #tpu.memory_space<vmem>>, %arg3: memref<128x128xbf16, #tpu.memory_space<vmem>>, %arg4: memref<1x128xf32, #tpu.memory_space<vmem>>, %arg5: memref<2x128x128xbf16, #tpu.memory_space<vmem>>, %arg6: memref<2x1x128xf32, #tpu.memory_space<vmem>>, %arg7: memref<2x128x128xbf16, #tpu.memory_space<vmem>>, %arg8: memref<2x1x128xf32, #tpu.memory_space<vmem>>, %arg9: memref<128x128xbf16, #tpu.memory_space<vmem>>, %arg10: memref<1x128xf32, #tpu.memory_space<vmem>>, %arg11: memref<8x128xf32, #tpu.memory_space<vmem>>, %arg12: memref<8x128xf32, #tpu.memory_space<vmem>>) attributes {dimension_semantics = [#tpu.dimension_semantics<parallel>, #tpu.dimension_semantics<arbitrary>], iteration_bounds = array<i64: 1, 2>, scalar_prefetch = 0 : i64, scratch_operands = 1 : i64, tpu.core_type = #tpu.core_type<tc>, window_params = [{transform_indices = @transform_0, window_bounds = array<i64: 8, 128>}, {pipeline_mode = #tpu.pipeline_mode<synchronous>, transform_indices = @transform_1, window_bounds = array<i64: 128, 128>}, {pipeline_mode = #tpu.pipeline_mode<synchronous>, transform_indices = @transform_2, window_bounds = array<i64: 1, 128>}, {pipeline_mode = #tpu.pipeline_mode<synchronous>, transform_indices = @transform_3, window_bounds = array<i64: 2, 128, 128>}, {pipeline_mode = #tpu.pipeline_mode<synchronous>, transform_indices = @transform_4, window_bounds = array<i64: 2, 1, 128>}, {pipeline_mode = #tpu.pipeline_mode<synchronous>, transform_indices = @transform_5, window_bounds = array<i64: 2, 128, 128>}, {pipeline_mode = #tpu.pipeline_mode<synchronous>, transform_indices = @transform_6, window_bounds = array<i64: 2, 1, 128>}, {pipeline_mode = #tpu.pipeline_mode<synchronous>, transform_indices = @transform_7, window_bounds = array<i64: 128, 128>}, {pipeline_mode = #tpu.pipeline_mode<synchronous>, transform_indices = @transform_8, window_bounds = array<i64: 1, 128>}, {transform_indices = @transform_9, window_bounds = array<i64: 8, 128>}]} {
    %c0_i32 = arith.constant 0 : i32
    %0 = arith.cmpi eq, %arg1, %c0_i32 : i32
    %1 = arith.extui %0 : i1 to i32
    %c0_i32_0 = arith.constant 0 : i32
    %2 = arith.cmpi ne, %1, %c0_i32_0 : i32
    scf.if %2 {
      %c0_18 = arith.constant 0 : index
      %c0_19 = arith.constant 0 : index
      %39 = vector.load %arg2[%c0_18, %c0_19] : memref<8x128xf32, #tpu.memory_space<vmem>>, vector<8x128xf32>
      %40 = arith.truncf %39 : vector<8x128xf32> to vector<8x128xbf16>
      %c0_20 = arith.constant 0 : index
      %c0_21 = arith.constant 0 : index
      %41 = vector.load %arg3[%c0_20, %c0_21] : memref<128x128xbf16, #tpu.memory_space<vmem>>, vector<128x128xbf16>
      %cst_22 = arith.constant dense<0.000000e+00> : vector<8x128xf32>
      %42 = tpu.matmul %40, %41, %cst_22 {dimension_numbers = #tpu.dot_dimension_numbers<[1], [0], [0], [1], [0, 0, 1, 1], [], []>} : vector<8x128xbf16>, vector<128x128xbf16>, vector<8x128xf32> -> vector<8x128xf32>
      %c0_23 = arith.constant 0 : index
      %c0_24 = arith.constant 0 : index
      %43 = vector.load %arg4[%c0_23, %c0_24] : memref<1x128xf32, #tpu.memory_space<vmem>>, vector<1x128xf32>
      %44 = vector.broadcast %43 : vector<1x128xf32> to vector<8x128xf32>
      %45 = arith.addf %42, %44 : vector<8x128xf32>
      %46 = math.tanh %45 : vector<8x128xf32>
      %c0_25 = arith.constant 0 : index
      %c0_26 = arith.constant 0 : index
      %47 = vector.load %arg12[%c0_25, %c0_26] : memref<8x128xf32, #tpu.memory_space<vmem>>, vector<8x128xf32>
      tpu.vector_store %arg12[%c0_25, %c0_26], %46 {strides = array<i32>} : memref<8x128xf32, #tpu.memory_space<vmem>>, vector<8x128xf32>,
    } else {
    }
    %c0 = arith.constant 0 : index
    %c0_1 = arith.constant 0 : index
    %3 = vector.load %arg12[%c0, %c0_1] : memref<8x128xf32, #tpu.memory_space<vmem>>, vector<8x128xf32>
    %4 = arith.truncf %3 : vector<8x128xf32> to vector<8x128xbf16>
    %5 = arith.index_cast %arg1 : i32 to index
    %c0_2 = arith.constant 0 : index
    %c0_3 = arith.constant 0 : index
    %6 = vector.load %arg5[%5, %c0_2, %c0_3] : memref<2x128x128xbf16, #tpu.memory_space<vmem>>, vector<1x128x128xbf16>
    %7 = vector.shape_cast %6 : vector<1x128x128xbf16> to vector<128x128xbf16>
    %cst = arith.constant dense<0.000000e+00> : vector<8x128xf32>
    %8 = tpu.matmul %4, %7, %cst {dimension_numbers = #tpu.dot_dimension_numbers<[1], [0], [0], [1], [0, 0, 1, 1], [], []>} : vector<8x128xbf16>, vector<128x128xbf16>, vector<8x128xf32> -> vector<8x128xf32>
    %9 = arith.index_cast %arg1 : i32 to index
    %c0_4 = arith.constant 0 : index
    %c0_5 = arith.constant 0 : index
    %10 = vector.load %arg6[%9, %c0_4, %c0_5] : memref<2x1x128xf32, #tpu.memory_space<vmem>>, vector<1x1x128xf32>
    %11 = vector.shape_cast %10 : vector<1x1x128xf32> to vector<1x128xf32>
    %12 = vector.broadcast %11 : vector<1x128xf32> to vector<8x128xf32>
    %13 = arith.addf %8, %12 : vector<8x128xf32>
    %cst_6 = arith.constant 0.000000e+00 : f32
    %14 = vector.broadcast %cst_6 : f32 to vector<8x128xf32>
    %15 = arith.cmpf ogt, %13, %14 : vector<8x128xf32>
    %cst_7 = arith.constant 2.000000e-01 : f32
    %16 = vector.broadcast %cst_7 : f32 to vector<8x128xf32>
    %17 = arith.mulf %16, %13 : vector<8x128xf32>
    %18 = arith.select %15, %13, %17 : vector<8x128xi1>, vector<8x128xf32>
    %19 = arith.truncf %18 : vector<8x128xf32> to vector<8x128xbf16>
    %20 = arith.index_cast %arg1 : i32 to index
    %c0_8 = arith.constant 0 : index
    %c0_9 = arith.constant 0 : index
    %21 = vector.load %arg7[%20, %c0_8, %c0_9] : memref<2x128x128xbf16, #tpu.memory_space<vmem>>, vector<1x128x128xbf16>
    %22 = vector.shape_cast %21 : vector<1x128x128xbf16> to vector<128x128xbf16>
    %cst_10 = arith.constant dense<0.000000e+00> : vector<8x128xf32>
    %23 = tpu.matmul %19, %22, %cst_10 {dimension_numbers = #tpu.dot_dimension_numbers<[1], [0], [0], [1], [0, 0, 1, 1], [], []>} : vector<8x128xbf16>, vector<128x128xbf16>, vector<8x128xf32> -> vector<8x128xf32>
    %24 = arith.index_cast %arg1 : i32 to index
    %c0_11 = arith.constant 0 : index
    %c0_12 = arith.constant 0 : index
    %25 = vector.load %arg8[%24, %c0_11, %c0_12] : memref<2x1x128xf32, #tpu.memory_space<vmem>>, vector<1x1x128xf32>
    %26 = vector.shape_cast %25 : vector<1x1x128xf32> to vector<1x128xf32>
    %27 = vector.broadcast %26 : vector<1x128xf32> to vector<8x128xf32>
    %28 = arith.addf %23, %27 : vector<8x128xf32>
    %29 = arith.addf %28, %3 : vector<8x128xf32>
    %cst_13 = arith.constant 0.000000e+00 : f32
    %30 = vector.broadcast %cst_13 : f32 to vector<8x128xf32>
    %31 = arith.cmpf ogt, %29, %30 : vector<8x128xf32>
    %cst_14 = arith.constant 2.000000e-01 : f32
    %32 = vector.broadcast %cst_14 : f32 to vector<8x128xf32>
    %33 = arith.mulf %32, %29 : vector<8x128xf32>
    %34 = arith.select %31, %29, %33 : vector<8x128xi1>, vector<8x128xf32>
    %c0_15 = arith.constant 0 : index
    %c0_16 = arith.constant 0 : index
    %35 = vector.load %arg12[%c0_15, %c0_16] : memref<8x128xf32, #tpu.memory_space<vmem>>, vector<8x128xf32>
    tpu.vector_store %arg12[%c0_15, %c0_16], %34 {strides = array<i32>} : memref<8x128xf32, #tpu.memory_space<vmem>>, vector<8x128xf32>,
    %c1_i32 = arith.constant 1 : i32
    %36 = arith.cmpi eq, %arg1, %c1_i32 : i32
    %37 = arith.extui %36 : i1 to i32
    %c0_i32_17 = arith.constant 0 : i32
    %38 = arith.cmpi ne, %37, %c0_i32_17 : i32
    scf.if %38 {
      %39 = arith.truncf %34 : vector<8x128xf32> to vector<8x128xbf16>
      %c0_18 = arith.constant 0 : index
      %c0_19 = arith.constant 0 : index
      %40 = vector.load %arg9[%c0_18, %c0_19] : memref<128x128xbf16, #tpu.memory_space<vmem>>, vector<128x128xbf16>
      %cst_20 = arith.constant dense<0.000000e+00> : vector<8x128xf32>
      %41 = tpu.matmul %39, %40, %cst_20 {dimension_numbers = #tpu.dot_dimension_numbers<[1], [0], [0], [1], [0, 0, 1, 1], [], []>} : vector<8x128xbf16>, vector<128x128xbf16>, vector<8x128xf32> -> vector<8x128xf32>
      %c0_21 = arith.constant 0 : index
      %c0_22 = arith.constant 0 : index
      %42 = vector.load %arg10[%c0_21, %c0_22] : memref<1x128xf32, #tpu.memory_space<vmem>>, vector<1x128xf32>
      %43 = vector.broadcast %42 : vector<1x128xf32> to vector<8x128xf32>
      %44 = arith.addf %41, %43 : vector<8x128xf32>
      %c0_23 = arith.constant 0 : index
      %c0_24 = arith.constant 0 : index
      %45 = vector.load %arg11[%c0_23, %c0_24] : memref<8x128xf32, #tpu.memory_space<vmem>>, vector<8x128xf32>
      tpu.vector_store %arg11[%c0_23, %c0_24], %44 {strides = array<i32>} : memref<8x128xf32, #tpu.memory_space<vmem>>, vector<8x128xf32>,
    } else {
    }
    return
  }
  func.func @transform_0(%arg0: i32, %arg1: i32) -> (i32, i32) {
    %c0_i32 = arith.constant 0 : i32
    %c0_i32_0 = arith.constant 0 : i32
    return %arg0, %c0_i32 : i32, i32
  }
  func.func @transform_1(%arg0: i32, %arg1: i32) -> (i32, i32) {
    %c0_i32 = arith.constant 0 : i32
    %c0_i32_0 = arith.constant 0 : i32
    %c0_i32_1 = arith.constant 0 : i32
    return %c0_i32, %c0_i32_0 : i32, i32
  }
  func.func @transform_2(%arg0: i32, %arg1: i32) -> (i32, i32) {
    %c0_i32 = arith.constant 0 : i32
    %c0_i32_0 = arith.constant 0 : i32
    %c0_i32_1 = arith.constant 0 : i32
    return %c0_i32, %c0_i32_0 : i32, i32
  }
  func.func @transform_3(%arg0: i32, %arg1: i32) -> (i32, i32, i32) {
    %c0_i32 = arith.constant 0 : i32
    %c0_i32_0 = arith.constant 0 : i32
    %c0_i32_1 = arith.constant 0 : i32
    %c0_i32_2 = arith.constant 0 : i32
    return %c0_i32, %c0_i32_0, %c0_i32_1 : i32, i32, i32
  }
  func.func @transform_4(%arg0: i32, %arg1: i32) -> (i32, i32, i32) {
    %c0_i32 = arith.constant 0 : i32
    %c0_i32_0 = arith.constant 0 : i32
    %c0_i32_1 = arith.constant 0 : i32
    %c0_i32_2 = arith.constant 0 : i32
    return %c0_i32, %c0_i32_0, %c0_i32_1 : i32, i32, i32
  }
  func.func @transform_5(%arg0: i32, %arg1: i32) -> (i32, i32, i32) {
    %c0_i32 = arith.constant 0 : i32
    %c0_i32_0 = arith.constant 0 : i32
    %c0_i32_1 = arith.constant 0 : i32
    %c0_i32_2 = arith.constant 0 : i32
    return %c0_i32, %c0_i32_0, %c0_i32_1 : i32, i32, i32
  }
  func.func @transform_6(%arg0: i32, %arg1: i32) -> (i32, i32, i32) {
    %c0_i32 = arith.constant 0 : i32
    %c0_i32_0 = arith.constant 0 : i32
    %c0_i32_1 = arith.constant 0 : i32
    %c0_i32_2 = arith.constant 0 : i32
    return %c0_i32, %c0_i32_0, %c0_i32_1 : i32, i32, i32
  }
  func.func @transform_7(%arg0: i32, %arg1: i32) -> (i32, i32) {
    %c0_i32 = arith.constant 0 : i32
    %c0_i32_0 = arith.constant 0 : i32
    %c0_i32_1 = arith.constant 0 : i32
    return %c0_i32, %c0_i32_0 : i32, i32
  }
  func.func @transform_8(%arg0: i32, %arg1: i32) -> (i32, i32) {
    %c0_i32 = arith.constant 0 : i32
    %c0_i32_0 = arith.constant 0 : i32
    %c0_i32_1 = arith.constant 0 : i32
    return %c0_i32, %c0_i32_0 : i32, i32
  }
  func.func @transform_9(%arg0: i32, %arg1: i32) -> (i32, i32) {
    %c0_i32 = arith.constant 0 : i32
    %c0_i32_0 = arith.constant 0 : i32
    return %arg0, %c0_i32 : i32, i32
  }
}

module attributes {stable_mosaic.version = 11 : i64} {
  func.func @gen_mlp_skip_kernel(%arg0: i32, %arg1: i32, %arg2: memref<8x128xf32, #tpu.memory_space<vmem>>, %arg3: memref<128x128xbf16, #tpu.memory_space<vmem>>, %arg4: memref<1x128xf32, #tpu.memory_space<vmem>>, %arg5: memref<2x128x128xbf16, #tpu.memory_space<vmem>>, %arg6: memref<2x1x128xf32, #tpu.memory_space<vmem>>, %arg7: memref<2x128x128xbf16, #tpu.memory_space<vmem>>, %arg8: memref<2x1x128xf32, #tpu.memory_space<vmem>>, %arg9: memref<128x128xbf16, #tpu.memory_space<vmem>>, %arg10: memref<1x128xf32, #tpu.memory_space<vmem>>, %arg11: memref<8x128xf32, #tpu.memory_space<vmem>>, %arg12: memref<8x128xf32, #tpu.memory_space<vmem>>) attributes {dimension_semantics = [#tpu.dimension_semantics<parallel>, #tpu.dimension_semantics<arbitrary>], iteration_bounds = array<i64: 1, 2>, scalar_prefetch = 0 : i64, scratch_operands = 1 : i64, tpu.core_type = #tpu.core_type<tc>, window_params = [{transform_indices = @transform_0, window_bounds = array<i64: 8, 128>}, {pipeline_mode = #tpu.pipeline_mode<synchronous>, transform_indices = @transform_1, window_bounds = array<i64: 128, 128>}, {pipeline_mode = #tpu.pipeline_mode<synchronous>, transform_indices = @transform_2, window_bounds = array<i64: 1, 128>}, {pipeline_mode = #tpu.pipeline_mode<synchronous>, transform_indices = @transform_3, window_bounds = array<i64: 2, 128, 128>}, {pipeline_mode = #tpu.pipeline_mode<synchronous>, transform_indices = @transform_4, window_bounds = array<i64: 2, 1, 128>}, {pipeline_mode = #tpu.pipeline_mode<synchronous>, transform_indices = @transform_5, window_bounds = array<i64: 2, 128, 128>}, {pipeline_mode = #tpu.pipeline_mode<synchronous>, transform_indices = @transform_6, window_bounds = array<i64: 2, 1, 128>}, {pipeline_mode = #tpu.pipeline_mode<synchronous>, transform_indices = @transform_7, window_bounds = array<i64: 128, 128>}, {pipeline_mode = #tpu.pipeline_mode<synchronous>, transform_indices = @transform_8, window_bounds = array<i64: 1, 128>}, {transform_indices = @transform_9, window_bounds = array<i64: 8, 128>}]} {
    %c0_i32 = arith.constant 0 : i32
    %0 = arith.cmpi eq, %arg1, %c0_i32 : i32
    %1 = arith.extui %0 : i1 to i32
    %c0_i32_0 = arith.constant 0 : i32
    %2 = arith.cmpi ne, %1, %c0_i32_0 : i32
    scf.if %2 {
      %c0_18 = arith.constant 0 : index
      %c0_19 = arith.constant 0 : index
      %39 = vector.load %arg2[%c0_18, %c0_19] : memref<8x128xf32, #tpu.memory_space<vmem>>, vector<8x128xf32>
      %40 = arith.truncf %39 : vector<8x128xf32> to vector<8x128xbf16>
      %c0_20 = arith.constant 0 : index
      %c0_21 = arith.constant 0 : index
      %41 = vector.load %arg3[%c0_20, %c0_21] : memref<128x128xbf16, #tpu.memory_space<vmem>>, vector<128x128xbf16>
      %cst_22 = arith.constant dense<0.000000e+00> : vector<8x128xf32>
      %42 = tpu.matmul %40, %41, %cst_22 {dimension_numbers = #tpu.dot_dimension_numbers<[1], [0], [0], [1], [0, 0, 1, 1], [], []>} : vector<8x128xbf16>, vector<128x128xbf16>, vector<8x128xf32> -> vector<8x128xf32>
      %c0_23 = arith.constant 0 : index
      %c0_24 = arith.constant 0 : index
      %43 = vector.load %arg4[%c0_23, %c0_24] : memref<1x128xf32, #tpu.memory_space<vmem>>, vector<1x128xf32>
      %44 = vector.broadcast %43 : vector<1x128xf32> to vector<8x128xf32>
      %45 = arith.addf %42, %44 : vector<8x128xf32>
      %46 = math.tanh %45 : vector<8x128xf32>
      %c0_25 = arith.constant 0 : index
      %c0_26 = arith.constant 0 : index
      %47 = vector.load %arg12[%c0_25, %c0_26] : memref<8x128xf32, #tpu.memory_space<vmem>>, vector<8x128xf32>
      tpu.vector_store %arg12[%c0_25, %c0_26], %46 {strides = array<i32>} : memref<8x128xf32, #tpu.memory_space<vmem>>, vector<8x128xf32>,
    } else {
    }
    %c0 = arith.constant 0 : index
    %c0_1 = arith.constant 0 : index
    %3 = vector.load %arg12[%c0, %c0_1] : memref<8x128xf32, #tpu.memory_space<vmem>>, vector<8x128xf32>
    %4 = arith.truncf %3 : vector<8x128xf32> to vector<8x128xbf16>
    %5 = arith.index_cast %arg1 : i32 to index
    %c0_2 = arith.constant 0 : index
    %c0_3 = arith.constant 0 : index
    %6 = vector.load %arg5[%5, %c0_2, %c0_3] : memref<2x128x128xbf16, #tpu.memory_space<vmem>>, vector<1x128x128xbf16>
    %7 = vector.shape_cast %6 : vector<1x128x128xbf16> to vector<128x128xbf16>
    %cst = arith.constant dense<0.000000e+00> : vector<8x128xf32>
    %8 = tpu.matmul %4, %7, %cst {dimension_numbers = #tpu.dot_dimension_numbers<[1], [0], [0], [1], [0, 0, 1, 1], [], []>} : vector<8x128xbf16>, vector<128x128xbf16>, vector<8x128xf32> -> vector<8x128xf32>
    %9 = arith.index_cast %arg1 : i32 to index
    %c0_4 = arith.constant 0 : index
    %c0_5 = arith.constant 0 : index
    %10 = vector.load %arg6[%9, %c0_4, %c0_5] : memref<2x1x128xf32, #tpu.memory_space<vmem>>, vector<1x1x128xf32>
    %11 = vector.shape_cast %10 : vector<1x1x128xf32> to vector<1x128xf32>
    %12 = vector.broadcast %11 : vector<1x128xf32> to vector<8x128xf32>
    %13 = arith.addf %8, %12 : vector<8x128xf32>
    %cst_6 = arith.constant 0.000000e+00 : f32
    %14 = vector.broadcast %cst_6 : f32 to vector<8x128xf32>
    %15 = arith.cmpf ogt, %13, %14 : vector<8x128xf32>
    %cst_7 = arith.constant 2.000000e-01 : f32
    %16 = vector.broadcast %cst_7 : f32 to vector<8x128xf32>
    %17 = arith.mulf %16, %13 : vector<8x128xf32>
    %18 = arith.select %15, %13, %17 : vector<8x128xi1>, vector<8x128xf32>
    %19 = arith.truncf %18 : vector<8x128xf32> to vector<8x128xbf16>
    %20 = arith.index_cast %arg1 : i32 to index
    %c0_8 = arith.constant 0 : index
    %c0_9 = arith.constant 0 : index
    %21 = vector.load %arg7[%20, %c0_8, %c0_9] : memref<2x128x128xbf16, #tpu.memory_space<vmem>>, vector<1x128x128xbf16>
    %22 = vector.shape_cast %21 : vector<1x128x128xbf16> to vector<128x128xbf16>
    %cst_10 = arith.constant dense<0.000000e+00> : vector<8x128xf32>
    %23 = tpu.matmul %19, %22, %cst_10 {dimension_numbers = #tpu.dot_dimension_numbers<[1], [0], [0], [1], [0, 0, 1, 1], [], []>} : vector<8x128xbf16>, vector<128x128xbf16>, vector<8x128xf32> -> vector<8x128xf32>
    %24 = arith.index_cast %arg1 : i32 to index
    %c0_11 = arith.constant 0 : index
    %c0_12 = arith.constant 0 : index
    %25 = vector.load %arg8[%24, %c0_11, %c0_12] : memref<2x1x128xf32, #tpu.memory_space<vmem>>, vector<1x1x128xf32>
    %26 = vector.shape_cast %25 : vector<1x1x128xf32> to vector<1x128xf32>
    %27 = vector.broadcast %26 : vector<1x128xf32> to vector<8x128xf32>
    %28 = arith.addf %23, %27 : vector<8x128xf32>
    %29 = arith.addf %28, %3 : vector<8x128xf32>
    %cst_13 = arith.constant 0.000000e+00 : f32
    %30 = vector.broadcast %cst_13 : f32 to vector<8x128xf32>
    %31 = arith.cmpf ogt, %29, %30 : vector<8x128xf32>
    %cst_14 = arith.constant 2.000000e-01 : f32
    %32 = vector.broadcast %cst_14 : f32 to vector<8x128xf32>
    %33 = arith.mulf %32, %29 : vector<8x128xf32>
    %34 = arith.select %31, %29, %33 : vector<8x128xi1>, vector<8x128xf32>
    %c0_15 = arith.constant 0 : index
    %c0_16 = arith.constant 0 : index
    %35 = vector.load %arg12[%c0_15, %c0_16] : memref<8x128xf32, #tpu.memory_space<vmem>>, vector<8x128xf32>
    tpu.vector_store %arg12[%c0_15, %c0_16], %34 {strides = array<i32>} : memref<8x128xf32, #tpu.memory_space<vmem>>, vector<8x128xf32>,
    %c1_i32 = arith.constant 1 : i32
    %36 = arith.cmpi eq, %arg1, %c1_i32 : i32
    %37 = arith.extui %36 : i1 to i32
    %c0_i32_17 = arith.constant 0 : i32
    %38 = arith.cmpi ne, %37, %c0_i32_17 : i32
    scf.if %38 {
      %39 = arith.truncf %34 : vector<8x128xf32> to vector<8x128xbf16>
      %c0_18 = arith.constant 0 : index
      %c0_19 = arith.constant 0 : index
      %40 = vector.load %arg9[%c0_18, %c0_19] : memref<128x128xbf16, #tpu.memory_space<vmem>>, vector<128x128xbf16>
      %cst_20 = arith.constant dense<0.000000e+00> : vector<8x128xf32>
      %41 = tpu.matmul %39, %40, %cst_20 {dimension_numbers = #tpu.dot_dimension_numbers<[1], [0], [0], [1], [0, 0, 1, 1], [], []>} : vector<8x128xbf16>, vector<128x128xbf16>, vector<8x128xf32> -> vector<8x128xf32>
      %c0_21 = arith.constant 0 : index
      %c0_22 = arith.constant 0 : index
      %42 = vector.load %arg10[%c0_21, %c0_22] : memref<1x128xf32, #tpu.memory_space<vmem>>, vector<1x128xf32>
      %43 = vector.broadcast %42 : vector<1x128xf32> to vector<8x128xf32>
      %44 = arith.addf %41, %43 : vector<8x128xf32>
      %c0_23 = arith.constant 0 : index
      %c0_24 = arith.constant 0 : index
      %45 = vector.load %arg11[%c0_23, %c0_24] : memref<8x128xf32, #tpu.memory_space<vmem>>, vector<8x128xf32>
      tpu.vector_store %arg11[%c0_23, %c0_24], %44 {strides = array<i32>} : memref<8x128xf32, #tpu.memory_space<vmem>>, vector<8x128xf32>,
    } else {
    }
    return
  }
  func.func @transform_0(%arg0: i32, %arg1: i32) -> (i32, i32) {
    %c0_i32 = arith.constant 0 : i32
    %c0_i32_0 = arith.constant 0 : i32
    return %arg0, %c0_i32 : i32, i32
  }
  func.func @transform_1(%arg0: i32, %arg1: i32) -> (i32, i32) {
    %c0_i32 = arith.constant 0 : i32
    %c0_i32_0 = arith.constant 0 : i32
    %c0_i32_1 = arith.constant 0 : i32
    return %c0_i32, %c0_i32_0 : i32, i32
  }
  func.func @transform_2(%arg0: i32, %arg1: i32) -> (i32, i32) {
    %c0_i32 = arith.constant 0 : i32
    %c0_i32_0 = arith.constant 0 : i32
    %c0_i32_1 = arith.constant 0 : i32
    return %c0_i32, %c0_i32_0 : i32, i32
  }
  func.func @transform_3(%arg0: i32, %arg1: i32) -> (i32, i32, i32) {
    %c0_i32 = arith.constant 0 : i32
    %c0_i32_0 = arith.constant 0 : i32
    %c0_i32_1 = arith.constant 0 : i32
    %c0_i32_2 = arith.constant 0 : i32
    return %c0_i32, %c0_i32_0, %c0_i32_1 : i32, i32, i32
  }
  func.func @transform_4(%arg0: i32, %arg1: i32) -> (i32, i32, i32) {
    %c0_i32 = arith.constant 0 : i32
    %c0_i32_0 = arith.constant 0 : i32
    %c0_i32_1 = arith.constant 0 : i32
    %c0_i32_2 = arith.constant 0 : i32
    return %c0_i32, %c0_i32_0, %c0_i32_1 : i32, i32, i32
  }
  func.func @transform_5(%arg0: i32, %arg1: i32) -> (i32, i32, i32) {
    %c0_i32 = arith.constant 0 : i32
    %c0_i32_0 = arith.constant 0 : i32
    %c0_i32_1 = arith.constant 0 : i32
    %c0_i32_2 = arith.constant 0 : i32
    return %c0_i32, %c0_i32_0, %c0_i32_1 : i32, i32, i32
  }
  func.func @transform_6(%arg0: i32, %arg1: i32) -> (i32, i32, i32) {
    %c0_i32 = arith.constant 0 : i32
    %c0_i32_0 = arith.constant 0 : i32
    %c0_i32_1 = arith.constant 0 : i32
    %c0_i32_2 = arith.constant 0 : i32
    return %c0_i32, %c0_i32_0, %c0_i32_1 : i32, i32, i32
  }
  func.func @transform_7(%arg0: i32, %arg1: i32) -> (i32, i32) {
    %c0_i32 = arith.constant 0 : i32
    %c0_i32_0 = arith.constant 0 : i32
    %c0_i32_1 = arith.constant 0 : i32
    return %c0_i32, %c0_i32_0 : i32, i32
  }
  func.func @transform_8(%arg0: i32, %arg1: i32) -> (i32, i32) {
    %c0_i32 = arith.constant 0 : i32
    %c0_i32_0 = arith.constant 0 : i32
    %c0_i32_1 = arith.constant 0 : i32
    return %c0_i32, %c0_i32_0 : i32, i32
  }
  func.func @transform_9(%arg0: i32, %arg1: i32) -> (i32, i32) {
    %c0_i32 = arith.constant 0 : i32
    %c0_i32_0 = arith.constant 0 : i32
    return %arg0, %c0_i32 : i32, i32
  }
}

</mosaic_0001>

<llo_original>
// kernel: tpu_custom_call.1
$region0: #{tpu_custom_call.1}
  #allocation0 [shape = 'u32[]', space=smem, size = 0x4, offset = 0x4, fixed_abs, tag = 'smem constant byte address 0x4 - core index']
  #allocation1 [shape = 'u32[72,128]{1,0:T(1,128)}', space=vmem, size = 0x9000, scoped, tag = 'internal scratch']
  #allocation2 [shape = 'f32[8,128]{1,0:T(8,128)}', space=vmem, size = 0x1000, scoped, tag = 'scratch operand']
  %s0 = inlined_call_operand.hbm [shape: f32[8,128], index: 0, kind: input, shape index: {}]
  %s1 = inlined_call_operand.hbm [shape: bf16[128,128], index: 1, kind: input, shape index: {}]
  %s2 = inlined_call_operand.hbm [shape: f32[1,128], index: 2, kind: input, shape index: {}]
  %s3 = inlined_call_operand.hbm [shape: bf16[2,128,128], index: 3, kind: input, shape index: {}]
  %s4 = inlined_call_operand.vmem [shape: f32[2,1,128], index: 4, kind: input, shape index: {}]
  %s5 = inlined_call_operand.hbm [shape: bf16[2,128,128], index: 5, kind: input, shape index: {}]
  %s6 = inlined_call_operand.vmem [shape: f32[2,1,128], index: 6, kind: input, shape index: {}]
  %s7 = inlined_call_operand.hbm [shape: bf16[128,128], index: 7, kind: input, shape index: {}]
  %s8 = inlined_call_operand.vmem [shape: f32[1,128], index: 8, kind: input, shape index: {}]
  %s9 = inlined_call_operand.hbm [shape: f32[8,128], index: 9, kind: output, shape index: {}]
  %s10 = sld [smem:[#allocation0]]
  $region101: #{tpu_custom_call.1} parent=0
    _
  %s12 = ssub.s32 1, %s10
  %s13 = scalar_select 0, %s12, %s10
  $region1: #{tpu_custom_call.1} parent=0
    #allocation3 [shape = 'u8[4096]{0}', space=vmem, size = 0x1000, scoped, tag = 'input window, operand 0, single buffered']
    #allocation4 [shape = 's32[2]{0}', space=sflag, size = 0x8, scoped, tag = 'scoped memory for tpu_custom_call.1']
    #allocation5 [shape = 's32[2]{0}', space=sflag, size = 0x8, scoped, tag = 'scoped memory for tpu_custom_call.1']
    #allocation6 [shape = 'u8[32768]{0}', space=vmem, size = 0x8000, scoped, tag = 'input window, operand 1, single buffered']
    #allocation7 [shape = 's32[1]{0}', space=sflag, size = 0x4, scoped, tag = 'scoped memory for tpu_custom_call.1']
    #allocation8 [shape = 'u8[512]{0}', space=vmem, size = 0x400, scoped, tag = 'input window, operand 2, single buffered']
    #allocation9 [shape = 'u8[65536]{0}', space=vmem, size = 0x10000, scoped, tag = 'input window, operand 3, single buffered']
    #allocation10 [shape = 's32[1]{0}', space=sflag, size = 0x4, scoped, tag = 'scoped memory for tpu_custom_call.1']
    #allocation11 [shape = 'u8[65536]{0}', space=vmem, size = 0x10000, scoped, tag = 'input window, operand 5, single buffered']
    #allocation12 [shape = 'u8[32768]{0}', space=vmem, size = 0x8000, scoped, tag = 'input window, operand 7, single buffered']
    #allocation13 [shape = 's32[1]{0}', space=sflag, size = 0x4, scoped, tag = 'scoped memory for tpu_custom_call.1']
    #allocation14 [shape = 'u8[4096]{0}', space=vmem, size = 0x1000, scoped, tag = 'output window, operand 0, single buffered']
    %14 = vsyncpa [#allocation4], 0
    %15 = vsyncpa [#allocation7], 0
    %16 = vsyncpa [#allocation10], 0
    %17 = vsyncpa [#allocation13], 0
    %18 = vsyncpa [#allocation5], 0
    loop: start=0, step=1, limit=4
    $region2: #{tpu_custom_call.1} parent=1 // loop_pre_header
      _
    $region3: #{tpu_custom_call.1} parent=1 // loop_header
      %s20 = sphi 0, %s24
      %p21 = scmp.ge.s32.totalorder %s20, 4
      %s27 = sphi 0, %s39
      %s28 = sphi 0, %s35
      %s29 = sphi 0, %s27
      %s30 = sphi 0, %s28
      %s31 = sphi 0, %s29
      %s32 = sphi 0, %s30
      %s42 = sphi 0, %s44
      %s45 = sphi 0, %s42
      %s46 = sphi 0, %s45
      %s62 = sphi 0, %s46
      %s66 = sphi 0, %s66
      %s68 = sphi 0, %s66
      %s69 = sphi 0, %s68
      %s83 = sphi 0, %s69
      %s87 = sphi 0, %s87
      %s89 = sphi 0, %s87
      %s90 = sphi 0, %s89
      %s104 = sphi 0, %s90
      %s108 = sphi 0, %s108
      %s110 = sphi 0, %s108
      %s111 = sphi 0, %s110
      %s125 = sphi 0, %s111
      %s129 = sphi 0, %s129
      %s131 = sphi 0, %s129
      %s132 = sphi 0, %s131
      %s146 = sphi 0, %s132
      %s150 = sphi 0, %s150
      %s152 = sphi 0, %s150
      %s153 = sphi 0, %s152
      %s167 = sphi 0, %s153
      %s171 = sphi 0, %s171
      %s173 = sphi 0, %s171
      %s174 = sphi 0, %s173
      %s188 = sphi 0, %s174
      %s192 = sphi 0, %s192
      %s194 = sphi 0, %s192
      %s195 = sphi 0, %s194
      %s209 = sphi 0, %s195
      %s213 = sphi 0, %s213
      %s215 = sphi 0, %s213
      %s216 = sphi 0, %s215
      %s230 = sphi 0, %s216
      %s236 = sphi 0, %s238
      %s239 = sphi 0, %s236
      %s240 = sphi 0, %s239
      %s256 = sphi 0, %s240
    $region4: #{tpu_custom_call.1} parent=1 // loop_header_branch
      %23 = sbr.rel (%p21) target = $region8
    $region5: #{tpu_custom_call.1} parent=1 // loop_body
      %s25 = ssub.s32 %s20, 1
      %s26 = ssub.s32 %s20, 2
      %s33 = sadd.s32 1, %s28
      %p34 = scmp.ge.s32.totalorder %s33, 2
      %s35 = scalar_select %p34, 0, %s33
      %s36 = sadd.s32 1, %s27
      %s37 = scalar_select %p34, %s36, %s27
      %p38 = scmp.ge.s32.totalorder %s37, 1
      %s39 = scalar_select %p38, 0, %s37
      %s40 = ssub.s32 %s27, %s39
      %p41 = scmp.eq.s32.totalorder %s40, 0
      %s43 = sadd.s32 %s42, 1
      %s44 = scalar_select %p41, %s42, %s43
      %p47 = pneg %p41
      %p48 = scmp.eq.s32.totalorder %s20, 1
      %p49 = por %p47, %p48
      %p50 = scmp.ne.s32.totalorder %s42, %s45
      %p51 = scmp.eq.s32.totalorder %s20, 0
      %p52 = por %p50, %p51
      %p53 = scmp.ne.s32.totalorder %s42, %s45
      %p54 = scmp.eq.s32.totalorder %s25, 1
      %p55 = por %p53, %p54
      %p56 = scmp.ne.s32.totalorder %s45, %s46
      %p57 = scmp.eq.s32.totalorder %s25, 0
      %p58 = por %p56, %p57
      %p59 = scmp.ne.s32.totalorder %s45, %s46
      %p60 = scmp.eq.s32.totalorder %s26, 1
      %p61 = por %p59, %p60
      %p63 = scmp.ne.s32.totalorder %s46, %s62
      %p64 = scmp.eq.s32.totalorder %s26, 0
      %p65 = por %p63, %p64
      %s67 = sadd.s32 %s66, 1
      %p70 = scmp.eq.s32.totalorder %s20, 1
      %p71 = scmp.ne.s32.totalorder %s66, %s68
      %p72 = scmp.eq.s32.totalorder %s20, 0
      %p73 = por %p71, %p72
      %p74 = scmp.ne.s32.totalorder %s66, %s68
      %p75 = scmp.eq.s32.totalorder %s25, 1
      %p76 = por %p74, %p75
      %p77 = scmp.ne.s32.totalorder %s68, %s69
      %p78 = scmp.eq.s32.totalorder %s25, 0
      %p79 = por %p77, %p78
      %p80 = scmp.ne.s32.totalorder %s68, %s69
      %p81 = scmp.eq.s32.totalorder %s26, 1
      %p82 = por %p80, %p81
      %p84 = scmp.ne.s32.totalorder %s69, %s83
      %p85 = scmp.eq.s32.totalorder %s26, 0
      %p86 = por %p84, %p85
      %s88 = sadd.s32 %s87, 1
      %p91 = scmp.eq.s32.totalorder %s20, 1
      %p92 = scmp.ne.s32.totalorder %s87, %s89
      %p93 = scmp.eq.s32.totalorder %s20, 0
      %p94 = por %p92, %p93
      %p95 = scmp.ne.s32.totalorder %s87, %s89
      %p96 = scmp.eq.s32.totalorder %s25, 1
      %p97 = por %p95, %p96
      %p98 = scmp.ne.s32.totalorder %s89, %s90
      %p99 = scmp.eq.s32.totalorder %s25, 0
      %p100 = por %p98, %p99
      %p101 = scmp.ne.s32.totalorder %s89, %s90
      %p102 = scmp.eq.s32.totalorder %s26, 1
      %p103 = por %p101, %p102
      %p105 = scmp.ne.s32.totalorder %s90, %s104
      %p106 = scmp.eq.s32.totalorder %s26, 0
      %p107 = por %p105, %p106
      %s109 = sadd.s32 %s108, 1
      %p112 = scmp.eq.s32.totalorder %s20, 1
      %p113 = scmp.ne.s32.totalorder %s108, %s110
      %p114 = scmp.eq.s32.totalorder %s20, 0
      %p115 = por %p113, %p114
      %p116 = scmp.ne.s32.totalorder %s108, %s110
      %p117 = scmp.eq.s32.totalorder %s25, 1
      %p118 = por %p116, %p117
      %p119 = scmp.ne.s32.totalorder %s110, %s111
      %p120 = scmp.eq.s32.totalorder %s25, 0
      %p121 = por %p119, %p120
      %p122 = scmp.ne.s32.totalorder %s110, %s111
      %p123 = scmp.eq.s32.totalorder %s26, 1
      %p124 = por %p122, %p123
      %p126 = scmp.ne.s32.totalorder %s111, %s125
      %p127 = scmp.eq.s32.totalorder %s26, 0
      %p128 = por %p126, %p127
      %s130 = sadd.s32 %s129, 1
      %p133 = scmp.eq.s32.totalorder %s20, 1
      %p134 = scmp.ne.s32.totalorder %s129, %s131
      %p135 = scmp.eq.s32.totalorder %s20, 0
      %p136 = por %p134, %p135
      %p137 = scmp.ne.s32.totalorder %s129, %s131
      %p138 = scmp.eq.s32.totalorder %s25, 1
      %p139 = por %p137, %p138
      %p140 = scmp.ne.s32.totalorder %s131, %s132
      %p141 = scmp.eq.s32.totalorder %s25, 0
      %p142 = por %p140, %p141
      %p143 = scmp.ne.s32.totalorder %s131, %s132
      %p144 = scmp.eq.s32.totalorder %s26, 1
      %p145 = por %p143, %p144
      %p147 = scmp.ne.s32.totalorder %s132, %s146
      %p148 = scmp.eq.s32.totalorder %s26, 0
      %p149 = por %p147, %p148
      %s151 = sadd.s32 %s150, 1
      %p154 = scmp.eq.s32.totalorder %s20, 1
      %p155 = scmp.ne.s32.totalorder %s150, %s152
      %p156 = scmp.eq.s32.totalorder %s20, 0
      %p157 = por %p155, %p156
      %p158 = scmp.ne.s32.totalorder %s150, %s152
      %p159 = scmp.eq.s32.totalorder %s25, 1
      %p160 = por %p158, %p159
      %p161 = scmp.ne.s32.totalorder %s152, %s153
      %p162 = scmp.eq.s32.totalorder %s25, 0
      %p163 = por %p161, %p162
      %p164 = scmp.ne.s32.totalorder %s152, %s153
      %p165 = scmp.eq.s32.totalorder %s26, 1
      %p166 = por %p164, %p165
      %p168 = scmp.ne.s32.totalorder %s153, %s167
      %p169 = scmp.eq.s32.totalorder %s26, 0
      %p170 = por %p168, %p169
      %s172 = sadd.s32 %s171, 1
      %p175 = scmp.eq.s32.totalorder %s20, 1
      %p176 = scmp.ne.s32.totalorder %s171, %s173
      %p177 = scmp.eq.s32.totalorder %s20, 0
      %p178 = por %p176, %p177
      %p179 = scmp.ne.s32.totalorder %s171, %s173
      %p180 = scmp.eq.s32.totalorder %s25, 1
      %p181 = por %p179, %p180
      %p182 = scmp.ne.s32.totalorder %s173, %s174
      %p183 = scmp.eq.s32.totalorder %s25, 0
      %p184 = por %p182, %p183
      %p185 = scmp.ne.s32.totalorder %s173, %s174
      %p186 = scmp.eq.s32.totalorder %s26, 1
      %p187 = por %p185, %p186
      %p189 = scmp.ne.s32.totalorder %s174, %s188
      %p190 = scmp.eq.s32.totalorder %s26, 0
      %p191 = por %p189, %p190
      %s193 = sadd.s32 %s192, 1
      %p196 = scmp.eq.s32.totalorder %s20, 1
      %p197 = scmp.ne.s32.totalorder %s192, %s194
      %p198 = scmp.eq.s32.totalorder %s20, 0
      %p199 = por %p197, %p198
      %p200 = scmp.ne.s32.totalorder %s192, %s194
      %p201 = scmp.eq.s32.totalorder %s25, 1
      %p202 = por %p200, %p201
      %p203 = scmp.ne.s32.totalorder %s194, %s195
      %p204 = scmp.eq.s32.totalorder %s25, 0
      %p205 = por %p203, %p204
      %p206 = scmp.ne.s32.totalorder %s194, %s195
      %p207 = scmp.eq.s32.totalorder %s26, 1
      %p208 = por %p206, %p207
      %p210 = scmp.ne.s32.totalorder %s195, %s209
      %p211 = scmp.eq.s32.totalorder %s26, 0
      %p212 = por %p210, %p211
      %s214 = sadd.s32 %s213, 1
      %p217 = scmp.eq.s32.totalorder %s20, 1
      %p218 = scmp.ne.s32.totalorder %s213, %s215
      %p219 = scmp.eq.s32.totalorder %s20, 0
      %p220 = por %p218, %p219
      %p221 = scmp.ne.s32.totalorder %s213, %s215
      %p222 = scmp.eq.s32.totalorder %s25, 1
      %p223 = por %p221, %p222
      %p224 = scmp.ne.s32.totalorder %s215, %s216
      %p225 = scmp.eq.s32.totalorder %s25, 0
      %p226 = por %p224, %p225
      %p227 = scmp.ne.s32.totalorder %s215, %s216
      %p228 = scmp.eq.s32.totalorder %s26, 1
      %p229 = por %p227, %p228
      %p231 = scmp.ne.s32.totalorder %s216, %s230
      %p232 = scmp.eq.s32.totalorder %s26, 0
      %p233 = por %p231, %p232
      %s234 = ssub.s32 %s27, %s39
      %p235 = scmp.eq.s32.totalorder %s234, 0
      %s237 = sadd.s32 %s236, 1
      %s238 = scalar_select %p235, %s236, %s237
      %p241 = pneg %p235
      %p242 = scmp.eq.s32.totalorder %s20, 1
      %p243 = por %p241, %p242
      %p244 = scmp.ne.s32.totalorder %s236, %s239
      %p245 = scmp.eq.s32.totalorder %s20, 0
      %p246 = por %p244, %p245
      %p247 = scmp.ne.s32.totalorder %s236, %s239
      %p248 = scmp.eq.s32.totalorder %s25, 1
      %p249 = por %p247, %p248
      %p250 = scmp.ne.s32.totalorder %s239, %s240
      %p251 = scmp.eq.s32.totalorder %s25, 0
      %p252 = por %p250, %p251
      %p253 = scmp.ne.s32.totalorder %s239, %s240
      %p254 = scmp.eq.s32.totalorder %s26, 1
      %p255 = por %p253, %p254
      %p257 = scmp.ne.s32.totalorder %s240, %s256
      %p258 = scmp.eq.s32.totalorder %s26, 0
      %p259 = por %p257, %p258
      %p260 = scmp.le.s32.totalorder 1, %s20
      %p261 = scmp.lt.s32.totalorder %s20, 3
      %p262 = pnand %p260, %p261
      %p263 = pneg %p262
      // Predicated region
      $region9: #{tpu_custom_call.1} parent=5 // pred_check
        _
      $region10: #{tpu_custom_call.1} parent=5 // pred_check_branch
        %265 = sbr.rel (%p262) target = $region12
      $region11: #{tpu_custom_call.1} parent=5 // pred_region
        %s266 = ssub.s32 %s20, 1
        // Predicated region
        $region13: #{tpu_custom_call.1} parent=11 // pred_check
          %p267 = pneg %p58
        $region14: #{tpu_custom_call.1} parent=11 // pred_check_branch
          %269 = sbr.rel (%p267) target = $region16
        $region15: #{tpu_custom_call.1} parent=11 // pred_region
          %271 = vsyncadd [#allocation4], 0
          %s272 = smul.addr %s29, 8
          %s273 = scalar_lea.hbm %s0, %s272
          %s275 = sshll.u32 %s273, 4
          %s276 = int_to_ptr.hbm [resolvable:$true] %s275
          %s277 = sshll.u32 [#allocation3], 4
          %s278 = int_to_ptr.vmem [resolvable:$true] %s277
          %280 = dma.hbm_to_vmem [thread:$0]  %s276, 128, %s278, [#allocation4]
        $region16: #{tpu_custom_call.1} parent=11 // pred_fallthru
          _
        // Predicated region
        $region17: #{tpu_custom_call.1} parent=11 // pred_check
          %p281 = pneg %p79
        $region18: #{tpu_custom_call.1} parent=11 // pred_check_branch
          %283 = sbr.rel (%p281) target = $region20
        $region19: #{tpu_custom_call.1} parent=11 // pred_region
          %285 = vsyncadd [#allocation7], 0
          %s286 = sshll.u32 %s1, 4
          %s287 = int_to_ptr.hbm [resolvable:$true] %s286
          %s288 = sshll.u32 [#allocation6], 4
          %s289 = int_to_ptr.vmem [resolvable:$true] %s288
          %294 = dma.hbm_to_vmem [thread:$0]  %s287, 1024, %s289, [#allocation7], 64, 64, 4
        $region20: #{tpu_custom_call.1} parent=11 // pred_fallthru
          _
        // Predicated region
        $region21: #{tpu_custom_call.1} parent=11 // pred_check
          %p295 = pneg %p100
        $region22: #{tpu_custom_call.1} parent=11 // pred_check_branch
          %297 = sbr.rel (%p295) target = $region24
        $region23: #{tpu_custom_call.1} parent=11 // pred_region
          %299 = vsyncadd [#allocation7], 0
          %s301 = sshll.u32 %s2, 4
          %s302 = int_to_ptr.hbm [resolvable:$true] %s301
          %s303 = sshll.u32 [#allocation8], 4
          %s304 = int_to_ptr.vmem [resolvable:$true] %s303
          %306 = dma.hbm_to_vmem [thread:$0]  %s302, 16, %s304, [#allocation7]
        $region24: #{tpu_custom_call.1} parent=11 // pred_fallthru
          _
        // Predicated region
        $region25: #{tpu_custom_call.1} parent=11 // pred_check
          %p307 = pneg %p121
        $region26: #{tpu_custom_call.1} parent=11 // pred_check_branch
          %309 = sbr.rel (%p307) target = $region28
        $region27: #{tpu_custom_call.1} parent=11 // pred_region
          %311 = vsyncadd [#allocation10], 0
          %s312 = sshll.u32 %s3, 4
          %s313 = int_to_ptr.hbm [resolvable:$true] %s312
          %s314 = sshll.u32 [#allocation9], 4
          %s315 = int_to_ptr.vmem [resolvable:$true] %s314
          %320 = dma.hbm_to_vmem [thread:$0]  %s313, 2048, %s315, [#allocation10], 64, 64, 4
        $region28: #{tpu_custom_call.1} parent=11 // pred_fallthru
          _
        // Predicated region
        $region29: #{tpu_custom_call.1} parent=11 // pred_check
          %p321 = pneg %p142
        $region30: #{tpu_custom_call.1} parent=11 // pred_check_branch
          %323 = sbr.rel (%p321) target = $region32
        $region31: #{tpu_custom_call.1} parent=11 // pred_region
          _
        $region32: #{tpu_custom_call.1} parent=11 // pred_fallthru
          _
        // Predicated region
        $region33: #{tpu_custom_call.1} parent=11 // pred_check
          %p324 = pneg %p163
        $region34: #{tpu_custom_call.1} parent=11 // pred_check_branch
          %326 = sbr.rel (%p324) target = $region36
        $region35: #{tpu_custom_call.1} parent=11 // pred_region
          %328 = vsyncadd [#allocation10], 0
          %s329 = sshll.u32 %s5, 4
          %s330 = int_to_ptr.hbm [resolvable:$true] %s329
          %s331 = sshll.u32 [#allocation11], 4
          %s332 = int_to_ptr.vmem [resolvable:$true] %s331
          %337 = dma.hbm_to_vmem [thread:$0]  %s330, 2048, %s332, [#allocation10], 64, 64, 4
        $region36: #{tpu_custom_call.1} parent=11 // pred_fallthru
          _
        // Predicated region
        $region37: #{tpu_custom_call.1} parent=11 // pred_check
          %p338 = pneg %p184
        $region38: #{tpu_custom_call.1} parent=11 // pred_check_branch
          %340 = sbr.rel (%p338) target = $region40
        $region39: #{tpu_custom_call.1} parent=11 // pred_region
          _
        $region40: #{tpu_custom_call.1} parent=11 // pred_fallthru
          _
        // Predicated region
        $region41: #{tpu_custom_call.1} parent=11 // pred_check
          %p341 = pneg %p205
        $region42: #{tpu_custom_call.1} parent=11 // pred_check_branch
          %343 = sbr.rel (%p341) target = $region44
        $region43: #{tpu_custom_call.1} parent=11 // pred_region
          %345 = vsyncadd [#allocation13], 0
          %s346 = sshll.u32 %s7, 4
          %s347 = int_to_ptr.hbm [resolvable:$true] %s346
          %s348 = sshll.u32 [#allocation12], 4
          %s349 = int_to_ptr.vmem [resolvable:$true] %s348
          %354 = dma.hbm_to_vmem [thread:$0]  %s347, 1024, %s349, [#allocation13], 64, 64, 4
        $region44: #{tpu_custom_call.1} parent=11 // pred_fallthru
          _
        // Predicated region
        $region45: #{tpu_custom_call.1} parent=11 // pred_check
          %p355 = pneg %p226
        $region46: #{tpu_custom_call.1} parent=11 // pred_check_branch
          %357 = sbr.rel (%p355) target = $region48
        $region47: #{tpu_custom_call.1} parent=11 // pred_region
          _
        $region48: #{tpu_custom_call.1} parent=11 // pred_fallthru
          _
      $region12: #{tpu_custom_call.1} parent=5 // pred_fallthru
        _
      %p358 = scmp.lt.s32.totalorder %s20, 2
      // Predicated region
      $region49: #{tpu_custom_call.1} parent=5 // pred_check
        %p359 = pneg %p358
      $region50: #{tpu_custom_call.1} parent=5 // pred_check_branch
        %361 = sbr.rel (%p359) target = $region52
      $region51: #{tpu_custom_call.1} parent=5 // pred_region
        _
      $region52: #{tpu_custom_call.1} parent=5 // pred_fallthru
        _
      %p362 = scmp.le.s32.totalorder 1, %s20
      %p363 = scmp.lt.s32.totalorder %s20, 3
      %p364 = pnand %p362, %p363
      %p365 = pneg %p364
      // Predicated region
      $region53: #{tpu_custom_call.1} parent=5 // pred_check
        _
      $region54: #{tpu_custom_call.1} parent=5 // pred_check_branch
        %367 = sbr.rel (%p364) target = $region56
      $region55: #{tpu_custom_call.1} parent=5 // pred_region
        %s368 = ssub.s32 %s20, 1
        // Predicated region
        $region57: #{tpu_custom_call.1} parent=55 // pred_check
          %p369 = pneg %p58
        $region58: #{tpu_custom_call.1} parent=55 // pred_check_branch
          %371 = sbr.rel (%p369) target = $region60
        $region59: #{tpu_custom_call.1} parent=55 // pred_region
          %373 = dma.done [#allocation4], 128
        $region60: #{tpu_custom_call.1} parent=55 // pred_fallthru
          _
        // Predicated region
        $region61: #{tpu_custom_call.1} parent=55 // pred_check
          %p374 = pneg %p79
        $region62: #{tpu_custom_call.1} parent=55 // pred_check_branch
          %376 = sbr.rel (%p374) target = $region64
        $region63: #{tpu_custom_call.1} parent=55 // pred_region
          %378 = dma.done [#allocation7], 1024
        $region64: #{tpu_custom_call.1} parent=55 // pred_fallthru
          _
        // Predicated region
        $region65: #{tpu_custom_call.1} parent=55 // pred_check
          %p379 = pneg %p100
        $region66: #{tpu_custom_call.1} parent=55 // pred_check_branch
          %381 = sbr.rel (%p379) target = $region68
        $region67: #{tpu_custom_call.1} parent=55 // pred_region
          %383 = dma.done [#allocation7], 16
        $region68: #{tpu_custom_call.1} parent=55 // pred_fallthru
          _
        // Predicated region
        $region69: #{tpu_custom_call.1} parent=55 // pred_check
          %p384 = pneg %p121
        $region70: #{tpu_custom_call.1} parent=55 // pred_check_branch
          %386 = sbr.rel (%p384) target = $region72
        $region71: #{tpu_custom_call.1} parent=55 // pred_region
          %388 = dma.done [#allocation10], 2048
        $region72: #{tpu_custom_call.1} parent=55 // pred_fallthru
          _
        // Predicated region
        $region73: #{tpu_custom_call.1} parent=55 // pred_check
          %p389 = pneg %p163
        $region74: #{tpu_custom_call.1} parent=55 // pred_check_branch
          %391 = sbr.rel (%p389) target = $region76
        $region75: #{tpu_custom_call.1} parent=55 // pred_region
          %393 = dma.done [#allocation10], 2048
        $region76: #{tpu_custom_call.1} parent=55 // pred_fallthru
          _
        // Predicated region
        $region77: #{tpu_custom_call.1} parent=55 // pred_check
          %p394 = pneg %p205
        $region78: #{tpu_custom_call.1} parent=55 // pred_check_branch
          %396 = sbr.rel (%p394) target = $region80
        $region79: #{tpu_custom_call.1} parent=55 // pred_region
          %398 = dma.done [#allocation13], 1024
        $region80: #{tpu_custom_call.1} parent=55 // pred_fallthru
          _
        %p399 = pneg %p58
        %p400 = pneg %p55
        %p401 = pneg %p79
        %p402 = pneg %p76
        %p403 = pneg %p100
        %p404 = pneg %p97
        %p405 = pneg %p121
        %p406 = pneg %p118
        %p407 = pneg %p142
        %p408 = pneg %p139
        %p409 = pneg %p163
        %p410 = pneg %p160
        %p411 = pneg %p184
        %p412 = pneg %p181
        %p413 = pneg %p205
        %p414 = pneg %p202
        %p415 = pneg %p226
        %p416 = pneg %p223
        %p417 = pneg %p252
        %p418 = pneg %p249
        %p419 = scmp.eq.s32.totalorder %s30, 0
        // Predicated region
        $region81: #{tpu_custom_call.1} parent=55 // pred_check
          %p420 = pneg %p419
        $region82: #{tpu_custom_call.1} parent=55 // pred_check_branch
          %422 = sbr.rel (%p420) target = $region84
        $region83: #{tpu_custom_call.1} parent=55 // pred_region
          %v423 = vld [vmem:[#allocation3] sm:$0xff]
          %v424 = vpack.c.bf16 %v423, %v423
          %v425 = vld [vmem:[#allocation6] sm:$0xf]
          %v426 = vld [vmem:[#allocation6 + $0x4] sm:$0xf]
          %v427 = vld [vmem:[#allocation6 + $0x8] sm:$0xf]
          %v428 = vld [vmem:[#allocation6 + $0xc] sm:$0xf]
          %v429 = vld [vmem:[#allocation6 + $0x10] sm:$0xf]
          %v430 = vld [vmem:[#allocation6 + $0x14] sm:$0xf]
          %v431 = vld [vmem:[#allocation6 + $0x18] sm:$0xf]
          %v432 = vld [vmem:[#allocation6 + $0x1c] sm:$0xf]
          %v433 = vld [vmem:[#allocation6 + $0x20] sm:$0xf]
          %v434 = vld [vmem:[#allocation6 + $0x24] sm:$0xf]
          %v435 = vld [vmem:[#allocation6 + $0x28] sm:$0xf]
          %v436 = vld [vmem:[#allocation6 + $0x2c] sm:$0xf]
          %v437 = vld [vmem:[#allocation6 + $0x30] sm:$0xf]
          %v438 = vld [vmem:[#allocation6 + $0x34] sm:$0xf]
          %v439 = vld [vmem:[#allocation6 + $0x38] sm:$0xf]
          %v440 = vld [vmem:[#allocation6 + $0x3c] sm:$0xf]
          %v441 = vld [vmem:[#allocation8] sm:$0x1]
          %v443 = vperm.slane %v441, 0
          %v461 = vunpack.c.l.b16 %v425
          %v462 = vunpack.c.l.b16 %v426
          %v463 = vunpack.c.l.b16 %v427
          %v464 = vunpack.c.l.b16 %v428
          %v465 = vunpack.c.l.b16 %v429
          %v466 = vunpack.c.l.b16 %v430
          %v467 = vunpack.c.l.b16 %v431
          %v468 = vunpack.c.l.b16 %v432
          %v469 = vunpack.c.l.b16 %v433
          %v470 = vunpack.c.l.b16 %v434
          %v471 = vunpack.c.l.b16 %v435
          %v472 = vunpack.c.l.b16 %v436
          %v473 = vunpack.c.l.b16 %v437
          %v474 = vunpack.c.l.b16 %v438
          %v475 = vunpack.c.l.b16 %v439
          %v476 = vunpack.c.l.b16 %v440
          %v477 = vpack.c.b16 %v462, %v461
          %v478 = vpack.c.b16 %v464, %v463
          %v479 = vpack.c.b16 %v466, %v465
          %v480 = vpack.c.b16 %v468, %v467
          %v481 = vpack.c.b16 %v470, %v469
          %v482 = vpack.c.b16 %v472, %v471
          %v483 = vpack.c.b16 %v474, %v473
          %v484 = vpack.c.b16 %v476, %v475
          %493 = vmatpush.bf16.msra.mxu0 %v484
          %494 = vmatpush.bf16.msra.mxu0 %v483
          %495 = vmatpush.bf16.msra.mxu0 %v482
          %496 = vmatpush.bf16.msra.mxu0 %v481
          %497 = vmatpush.bf16.msra.mxu0 %v480
          %498 = vmatpush.bf16.msra.mxu0 %v479
          %499 = vmatpush.bf16.msra.mxu0 %v478
          %500 = vmatpush.bf16.msra.mxu0 %v477
          %501 = vmatmul.bf16.gmra.mxu0 %v424
          %v502 = vpop.f32.mrf.mxu0
          %v503 = vadd.f32 %v443, %v502
          %v504 = vpop.f32.mrf.mxu0
          %505 = vdwg.mxu0
          %v506 = vtanh.pop %v503
          %507 = vst [vmem:[#allocation2] sm:$0xff] %v506
        $region84: #{tpu_custom_call.1} parent=55 // pred_fallthru
          _
        %v508 = vld [vmem:[#allocation2] sm:$0xff]
        %v509 = vpack.c.bf16 %v508, %v508
        %s510 = smul.u32 %s30, 16
        %s511 = smul.addr %s510, 4
        %s512 = scalar_lea.vmem [#allocation9], %s511
        %v513 = vld [vmem:[%s512] sm:$0xf]
        %v514 = vld [vmem:[%s512 + $0x4] sm:$0xf]
        %v515 = vld [vmem:[%s512 + $0x8] sm:$0xf]
        %v516 = vld [vmem:[%s512 + $0xc] sm:$0xf]
        %v517 = vld [vmem:[%s512 + $0x10] sm:$0xf]
        %v518 = vld [vmem:[%s512 + $0x14] sm:$0xf]
        %v519 = vld [vmem:[%s512 + $0x18] sm:$0xf]
        %v520 = vld [vmem:[%s512 + $0x1c] sm:$0xf]
        %v521 = vld [vmem:[%s512 + $0x20] sm:$0xf]
        %v522 = vld [vmem:[%s512 + $0x24] sm:$0xf]
        %v523 = vld [vmem:[%s512 + $0x28] sm:$0xf]
        %v524 = vld [vmem:[%s512 + $0x2c] sm:$0xf]
        %v525 = vld [vmem:[%s512 + $0x30] sm:$0xf]
        %v526 = vld [vmem:[%s512 + $0x34] sm:$0xf]
        %v527 = vld [vmem:[%s512 + $0x38] sm:$0xf]
        %v528 = vld [vmem:[%s512 + $0x3c] sm:$0xf]
        %s529 = scalar_lea.vmem %s4, %s30
        %v530 = vld [vmem:[%s529] sm:$0x1]
        %v532 = vperm.slane %v530, 0
        %v550 = vunpack.c.l.b16 %v513
        %v551 = vunpack.c.l.b16 %v514
        %v552 = vunpack.c.l.b16 %v515
        %v553 = vunpack.c.l.b16 %v516
        %v554 = vunpack.c.l.b16 %v517
        %v555 = vunpack.c.l.b16 %v518
        %v556 = vunpack.c.l.b16 %v519
        %v557 = vunpack.c.l.b16 %v520
        %v558 = vunpack.c.l.b16 %v521
        %v559 = vunpack.c.l.b16 %v522
        %v560 = vunpack.c.l.b16 %v523
        %v561 = vunpack.c.l.b16 %v524
        %v562 = vunpack.c.l.b16 %v525
        %v563 = vunpack.c.l.b16 %v526
        %v564 = vunpack.c.l.b16 %v527
        %v565 = vunpack.c.l.b16 %v528
        %v566 = vpack.c.b16 %v551, %v550
        %v567 = vpack.c.b16 %v553, %v552
        %v568 = vpack.c.b16 %v555, %v554
        %v569 = vpack.c.b16 %v557, %v556
        %v570 = vpack.c.b16 %v559, %v558
        %v571 = vpack.c.b16 %v561, %v560
        %v572 = vpack.c.b16 %v563, %v562
        %v573 = vpack.c.b16 %v565, %v564
        %582 = vmatpush.bf16.msra.mxu0 %v573
        %583 = vmatpush.bf16.msra.mxu0 %v572
        %584 = vmatpush.bf16.msra.mxu0 %v571
        %585 = vmatpush.bf16.msra.mxu0 %v570
        %586 = vmatpush.bf16.msra.mxu0 %v569
        %587 = vmatpush.bf16.msra.mxu0 %v568
        %588 = vmatpush.bf16.msra.mxu0 %v567
        %589 = vmatpush.bf16.msra.mxu0 %v566
        %590 = vmatmul.bf16.gmra.mxu0 %v509
        %v591 = vpop.f32.mrf.mxu0
        %v592 = vadd.f32 %v532, %v591
        %v593 = vpop.f32.mrf.mxu0
        %594 = vdwg.mxu0
        %vm595 = vcmp.gt.f32.partialorder %v592, 0.0
        %v596 = vmul.f32 %v592, 0.2
        %v597 = vsel %vm595, %v592, %v596
        %v598 = vpack.c.bf16 %v597, %v597
        %s599 = smul.addr %s510, 4
        %s600 = scalar_lea.vmem [#allocation11], %s599
        %v601 = vld [vmem:[%s600] sm:$0xf]
        %v602 = vld [vmem:[%s600 + $0x4] sm:$0xf]
        %v603 = vld [vmem:[%s600 + $0x8] sm:$0xf]
        %v604 = vld [vmem:[%s600 + $0xc] sm:$0xf]
        %v605 = vld [vmem:[%s600 + $0x10] sm:$0xf]
        %v606 = vld [vmem:[%s600 + $0x14] sm:$0xf]
        %v607 = vld [vmem:[%s600 + $0x18] sm:$0xf]
        %v608 = vld [vmem:[%s600 + $0x1c] sm:$0xf]
        %v609 = vld [vmem:[%s600 + $0x20] sm:$0xf]
        %v610 = vld [vmem:[%s600 + $0x24] sm:$0xf]
        %v611 = vld [vmem:[%s600 + $0x28] sm:$0xf]
        %v612 = vld [vmem:[%s600 + $0x2c] sm:$0xf]
        %v613 = vld [vmem:[%s600 + $0x30] sm:$0xf]
        %v614 = vld [vmem:[%s600 + $0x34] sm:$0xf]
        %v615 = vld [vmem:[%s600 + $0x38] sm:$0xf]
        %v616 = vld [vmem:[%s600 + $0x3c] sm:$0xf]
        %s617 = scalar_lea.vmem %s6, %s30
        %v618 = vld [vmem:[%s617] sm:$0x1]
        %v620 = vperm.slane %v618, 0
        %v638 = vunpack.c.l.b16 %v601
        %v639 = vunpack.c.l.b16 %v602
        %v640 = vunpack.c.l.b16 %v603
        %v641 = vunpack.c.l.b16 %v604
        %v642 = vunpack.c.l.b16 %v605
        %v643 = vunpack.c.l.b16 %v606
        %v644 = vunpack.c.l.b16 %v607
        %v645 = vunpack.c.l.b16 %v608
        %v646 = vunpack.c.l.b16 %v609
        %v647 = vunpack.c.l.b16 %v610
        %v648 = vunpack.c.l.b16 %v611
        %v649 = vunpack.c.l.b16 %v612
        %v650 = vunpack.c.l.b16 %v613
        %v651 = vunpack.c.l.b16 %v614
        %v652 = vunpack.c.l.b16 %v615
        %v653 = vunpack.c.l.b16 %v616
        %v654 = vpack.c.b16 %v639, %v638
        %v655 = vpack.c.b16 %v641, %v640
        %v656 = vpack.c.b16 %v643, %v642
        %v657 = vpack.c.b16 %v645, %v644
        %v658 = vpack.c.b16 %v647, %v646
        %v659 = vpack.c.b16 %v649, %v648
        %v660 = vpack.c.b16 %v651, %v650
        %v661 = vpack.c.b16 %v653, %v652
        %670 = vmatpush.bf16.msra.mxu0 %v661
        %671 = vmatpush.bf16.msra.mxu0 %v660
        %672 = vmatpush.bf16.msra.mxu0 %v659
        %673 = vmatpush.bf16.msra.mxu0 %v658
        %674 = vmatpush.bf16.msra.mxu0 %v657
        %675 = vmatpush.bf16.msra.mxu0 %v656
        %676 = vmatpush.bf16.msra.mxu0 %v655
        %677 = vmatpush.bf16.msra.mxu0 %v654
        %678 = vmatmul.bf16.gmra.mxu0 %v598
        %v679 = vpop.f32.mrf.mxu0
        %v680 = vadd.f32 %v620, %v679
        %v681 = vpop.f32.mrf.mxu0
        %682 = vdwg.mxu0
        %v683 = vadd.f32 %v680, %v508
        %vm684 = vcmp.gt.f32.partialorder %v683, 0.0
        %v685 = vmul.f32 %v683, 0.2
        %v686 = vsel %vm684, %v683, %v685
        %687 = vst [vmem:[#allocation2] sm:$0xff] %v686
        %p688 = scmp.eq.s32.totalorder %s30, 1
        // Predicated region
        $region85: #{tpu_custom_call.1} parent=55 // pred_check
          %p689 = pneg %p688
        $region86: #{tpu_custom_call.1} parent=55 // pred_check_branch
          %691 = sbr.rel (%p689) target = $region88
        $region87: #{tpu_custom_call.1} parent=55 // pred_region
          %v692 = vpack.c.bf16 %v686, %v686
          %v693 = vld [vmem:[#allocation12] sm:$0xf]
          %v694 = vld [vmem:[#allocation12 + $0x4] sm:$0xf]
          %v695 = vld [vmem:[#allocation12 + $0x8] sm:$0xf]
          %v696 = vld [vmem:[#allocation12 + $0xc] sm:$0xf]
          %v697 = vld [vmem:[#allocation12 + $0x10] sm:$0xf]
          %v698 = vld [vmem:[#allocation12 + $0x14] sm:$0xf]
          %v699 = vld [vmem:[#allocation12 + $0x18] sm:$0xf]
          %v700 = vld [vmem:[#allocation12 + $0x1c] sm:$0xf]
          %v701 = vld [vmem:[#allocation12 + $0x20] sm:$0xf]
          %v702 = vld [vmem:[#allocation12 + $0x24] sm:$0xf]
          %v703 = vld [vmem:[#allocation12 + $0x28] sm:$0xf]
          %v704 = vld [vmem:[#allocation12 + $0x2c] sm:$0xf]
          %v705 = vld [vmem:[#allocation12 + $0x30] sm:$0xf]
          %v706 = vld [vmem:[#allocation12 + $0x34] sm:$0xf]
          %v707 = vld [vmem:[#allocation12 + $0x38] sm:$0xf]
          %v708 = vld [vmem:[#allocation12 + $0x3c] sm:$0xf]
          %v709 = vld [vmem:[%s8] sm:$0x1]
          %v711 = vperm.slane %v709, 0
          %v729 = vunpack.c.l.b16 %v693
          %v730 = vunpack.c.l.b16 %v694
          %v731 = vunpack.c.l.b16 %v695
          %v732 = vunpack.c.l.b16 %v696
          %v733 = vunpack.c.l.b16 %v697
          %v734 = vunpack.c.l.b16 %v698
          %v735 = vunpack.c.l.b16 %v699
          %v736 = vunpack.c.l.b16 %v700
          %v737 = vunpack.c.l.b16 %v701
          %v738 = vunpack.c.l.b16 %v702
          %v739 = vunpack.c.l.b16 %v703
          %v740 = vunpack.c.l.b16 %v704
          %v741 = vunpack.c.l.b16 %v705
          %v742 = vunpack.c.l.b16 %v706
          %v743 = vunpack.c.l.b16 %v707
          %v744 = vunpack.c.l.b16 %v708
          %v745 = vpack.c.b16 %v730, %v729
          %v746 = vpack.c.b16 %v732, %v731
          %v747 = vpack.c.b16 %v734, %v733
          %v748 = vpack.c.b16 %v736, %v735
          %v749 = vpack.c.b16 %v738, %v737
          %v750 = vpack.c.b16 %v740, %v739
          %v751 = vpack.c.b16 %v742, %v741
          %v752 = vpack.c.b16 %v744, %v743
          %761 = vmatpush.bf16.msra.mxu0 %v752
          %762 = vmatpush.bf16.msra.mxu0 %v751
          %763 = vmatpush.bf16.msra.mxu0 %v750
          %764 = vmatpush.bf16.msra.mxu0 %v749
          %765 = vmatpush.bf16.msra.mxu0 %v748
          %766 = vmatpush.bf16.msra.mxu0 %v747
          %767 = vmatpush.bf16.msra.mxu0 %v746
          %768 = vmatpush.bf16.msra.mxu0 %v745
          %769 = vmatmul.bf16.gmra.mxu0 %v692
          %v770 = vpop.f32.mrf.mxu0
          %v771 = vadd.f32 %v711, %v770
          %v772 = vpop.f32.mrf.mxu0
          %773 = vdwg.mxu0
          %774 = vst [vmem:[#allocation14] sm:$0xff] %v771
        $region88: #{tpu_custom_call.1} parent=55 // pred_fallthru
          _
        // Predicated region
        $region89: #{tpu_custom_call.1} parent=55 // pred_check
          %p775 = pneg %p249
        $region90: #{tpu_custom_call.1} parent=55 // pred_check_branch
          %777 = sbr.rel (%p775) target = $region92
        $region91: #{tpu_custom_call.1} parent=55 // pred_region
          %779 = vsyncadd [#allocation5], 0
          %s780 = smul.addr %s29, 8
          %s781 = scalar_lea.hbm %s9, %s780
          %s783 = sshll.u32 [#allocation14], 4
          %s784 = int_to_ptr.vmem [resolvable:$true] %s783
          %s785 = sshll.u32 %s781, 4
          %s786 = int_to_ptr.hbm [resolvable:$true] %s785
          %788 = dma.vmem_to_hbm [thread:$0]  %s784, 128, %s786, [#allocation5]
        $region92: #{tpu_custom_call.1} parent=55 // pred_fallthru
          _
        // Predicated region
        $region93: #{tpu_custom_call.1} parent=55 // pred_check
          %p789 = pneg %p249
        $region94: #{tpu_custom_call.1} parent=55 // pred_check_branch
          %791 = sbr.rel (%p789) target = $region96
        $region95: #{tpu_custom_call.1} parent=55 // pred_region
          %793 = dma.done [#allocation5], 128
        $region96: #{tpu_custom_call.1} parent=55 // pred_fallthru
          _
      $region56: #{tpu_custom_call.1} parent=5 // pred_fallthru
        _
      %p794 = scmp.le.s32.totalorder 2, %s20
      // Predicated region
      $region97: #{tpu_custom_call.1} parent=5 // pred_check
        %p795 = pneg %p794
      $region98: #{tpu_custom_call.1} parent=5 // pred_check_branch
        %797 = sbr.rel (%p795) target = $region100
      $region99: #{tpu_custom_call.1} parent=5 // pred_region
        %s798 = ssub.s32 %s20, 2
      $region100: #{tpu_custom_call.1} parent=5 // pred_fallthru
        _
    $region6: #{tpu_custom_call.1} parent=1 // loop_footer
      %s24 = sadd.s32 1, %s20
    $region7: #{tpu_custom_call.1} parent=1 // loop_footer_branch
      %19 = sbr.rel target = $region3
    $region8: #{tpu_custom_call.1} parent=1 // loop_exit
      _
    %799 = vsyncpa [#allocation4], 1
    %s800 = scalar_lea.sflag [#allocation4], 1
    %801 = vsyncpa %s800, 1
    %802 = vsyncpa [#allocation7], 1
    %803 = vsyncpa [#allocation10], 1
    %804 = vsyncpa [#allocation13], 1
    %805 = vsyncpa [#allocation5], 1
    %s806 = scalar_lea.sflag [#allocation5], 1
    %807 = vsyncpa %s806, 1

// kernel: tpu_custom_call.1
$region0: #{tpu_custom_call.1}
  #allocation0 [shape = 'u32[]', space=smem, size = 0x4, offset = 0x4, fixed_abs, tag = 'smem constant byte address 0x4 - core index']
  #allocation1 [shape = 'u32[72,128]{1,0:T(1,128)}', space=vmem, size = 0x9000, scoped, tag = 'internal scratch']
  #allocation2 [shape = 'f32[8,128]{1,0:T(8,128)}', space=vmem, size = 0x1000, scoped, tag = 'scratch operand']
  %s0 = inlined_call_operand.hbm [shape: f32[8,128], index: 0, kind: input, shape index: {}]
  %s1 = inlined_call_operand.hbm [shape: bf16[128,128], index: 1, kind: input, shape index: {}]
  %s2 = inlined_call_operand.hbm [shape: f32[1,128], index: 2, kind: input, shape index: {}]
  %s3 = inlined_call_operand.hbm [shape: bf16[2,128,128], index: 3, kind: input, shape index: {}]
  %s4 = inlined_call_operand.vmem [shape: f32[2,1,128], index: 4, kind: input, shape index: {}]
  %s5 = inlined_call_operand.hbm [shape: bf16[2,128,128], index: 5, kind: input, shape index: {}]
  %s6 = inlined_call_operand.vmem [shape: f32[2,1,128], index: 6, kind: input, shape index: {}]
  %s7 = inlined_call_operand.hbm [shape: bf16[128,128], index: 7, kind: input, shape index: {}]
  %s8 = inlined_call_operand.vmem [shape: f32[1,128], index: 8, kind: input, shape index: {}]
  %s9 = inlined_call_operand.hbm [shape: f32[8,128], index: 9, kind: output, shape index: {}]
  %s10 = sld [smem:[#allocation0]]
  $region101: #{tpu_custom_call.1} parent=0
    _
  %s12 = ssub.s32 1, %s10
  %s13 = scalar_select 0, %s12, %s10
  $region1: #{tpu_custom_call.1} parent=0
    #allocation3 [shape = 'u8[4096]{0}', space=vmem, size = 0x1000, scoped, tag = 'input window, operand 0, single buffered']
    #allocation4 [shape = 's32[2]{0}', space=sflag, size = 0x8, scoped, tag = 'scoped memory for tpu_custom_call.1']
    #allocation5 [shape = 's32[2]{0}', space=sflag, size = 0x8, scoped, tag = 'scoped memory for tpu_custom_call.1']
    #allocation6 [shape = 'u8[32768]{0}', space=vmem, size = 0x8000, scoped, tag = 'input window, operand 1, single buffered']
    #allocation7 [shape = 's32[1]{0}', space=sflag, size = 0x4, scoped, tag = 'scoped memory for tpu_custom_call.1']
    #allocation8 [shape = 'u8[512]{0}', space=vmem, size = 0x400, scoped, tag = 'input window, operand 2, single buffered']
    #allocation9 [shape = 'u8[65536]{0}', space=vmem, size = 0x10000, scoped, tag = 'input window, operand 3, single buffered']
    #allocation10 [shape = 's32[1]{0}', space=sflag, size = 0x4, scoped, tag = 'scoped memory for tpu_custom_call.1']
    #allocation11 [shape = 'u8[65536]{0}', space=vmem, size = 0x10000, scoped, tag = 'input window, operand 5, single buffered']
    #allocation12 [shape = 'u8[32768]{0}', space=vmem, size = 0x8000, scoped, tag = 'input window, operand 7, single buffered']
    #allocation13 [shape = 's32[1]{0}', space=sflag, size = 0x4, scoped, tag = 'scoped memory for tpu_custom_call.1']
    #allocation14 [shape = 'u8[4096]{0}', space=vmem, size = 0x1000, scoped, tag = 'output window, operand 0, single buffered']
    %14 = vsyncpa [#allocation4], 0
    %15 = vsyncpa [#allocation7], 0
    %16 = vsyncpa [#allocation10], 0
    %17 = vsyncpa [#allocation13], 0
    %18 = vsyncpa [#allocation5], 0
    loop: start=0, step=1, limit=4
    $region2: #{tpu_custom_call.1} parent=1 // loop_pre_header
      _
    $region3: #{tpu_custom_call.1} parent=1 // loop_header
      %s20 = sphi 0, %s24
      %p21 = scmp.ge.s32.totalorder %s20, 4
      %s27 = sphi 0, %s39
      %s28 = sphi 0, %s35
      %s29 = sphi 0, %s27
      %s30 = sphi 0, %s28
      %s31 = sphi 0, %s29
      %s32 = sphi 0, %s30
      %s42 = sphi 0, %s44
      %s45 = sphi 0, %s42
      %s46 = sphi 0, %s45
      %s62 = sphi 0, %s46
      %s66 = sphi 0, %s66
      %s68 = sphi 0, %s66
      %s69 = sphi 0, %s68
      %s83 = sphi 0, %s69
      %s87 = sphi 0, %s87
      %s89 = sphi 0, %s87
      %s90 = sphi 0, %s89
      %s104 = sphi 0, %s90
      %s108 = sphi 0, %s108
      %s110 = sphi 0, %s108
      %s111 = sphi 0, %s110
      %s125 = sphi 0, %s111
      %s129 = sphi 0, %s129
      %s131 = sphi 0, %s129
      %s132 = sphi 0, %s131
      %s146 = sphi 0, %s132
      %s150 = sphi 0, %s150
      %s152 = sphi 0, %s150
      %s153 = sphi 0, %s152
      %s167 = sphi 0, %s153
      %s171 = sphi 0, %s171
      %s173 = sphi 0, %s171
      %s174 = sphi 0, %s173
      %s188 = sphi 0, %s174
      %s192 = sphi 0, %s192
      %s194 = sphi 0, %s192
      %s195 = sphi 0, %s194
      %s209 = sphi 0, %s195
      %s213 = sphi 0, %s213
      %s215 = sphi 0, %s213
      %s216 = sphi 0, %s215
      %s230 = sphi 0, %s216
      %s236 = sphi 0, %s238
      %s239 = sphi 0, %s236
      %s240 = sphi 0, %s239
      %s256 = sphi 0, %s240
    $region4: #{tpu_custom_call.1} parent=1 // loop_header_branch
      %23 = sbr.rel (%p21) target = $region8
    $region5: #{tpu_custom_call.1} parent=1 // loop_body
      %s25 = ssub.s32 %s20, 1
      %s26 = ssub.s32 %s20, 2
      %s33 = sadd.s32 1, %s28
      %p34 = scmp.ge.s32.totalorder %s33, 2
      %s35 = scalar_select %p34, 0, %s33
      %s36 = sadd.s32 1, %s27
      %s37 = scalar_select %p34, %s36, %s27
      %p38 = scmp.ge.s32.totalorder %s37, 1
      %s39 = scalar_select %p38, 0, %s37
      %s40 = ssub.s32 %s27, %s39
      %p41 = scmp.eq.s32.totalorder %s40, 0
      %s43 = sadd.s32 %s42, 1
      %s44 = scalar_select %p41, %s42, %s43
      %p47 = pneg %p41
      %p48 = scmp.eq.s32.totalorder %s20, 1
      %p49 = por %p47, %p48
      %p50 = scmp.ne.s32.totalorder %s42, %s45
      %p51 = scmp.eq.s32.totalorder %s20, 0
      %p52 = por %p50, %p51
      %p53 = scmp.ne.s32.totalorder %s42, %s45
      %p54 = scmp.eq.s32.totalorder %s25, 1
      %p55 = por %p53, %p54
      %p56 = scmp.ne.s32.totalorder %s45, %s46
      %p57 = scmp.eq.s32.totalorder %s25, 0
      %p58 = por %p56, %p57
      %p59 = scmp.ne.s32.totalorder %s45, %s46
      %p60 = scmp.eq.s32.totalorder %s26, 1
      %p61 = por %p59, %p60
      %p63 = scmp.ne.s32.totalorder %s46, %s62
      %p64 = scmp.eq.s32.totalorder %s26, 0
      %p65 = por %p63, %p64
      %s67 = sadd.s32 %s66, 1
      %p70 = scmp.eq.s32.totalorder %s20, 1
      %p71 = scmp.ne.s32.totalorder %s66, %s68
      %p72 = scmp.eq.s32.totalorder %s20, 0
      %p73 = por %p71, %p72
      %p74 = scmp.ne.s32.totalorder %s66, %s68
      %p75 = scmp.eq.s32.totalorder %s25, 1
      %p76 = por %p74, %p75
      %p77 = scmp.ne.s32.totalorder %s68, %s69
      %p78 = scmp.eq.s32.totalorder %s25, 0
      %p79 = por %p77, %p78
      %p80 = scmp.ne.s32.totalorder %s68, %s69
      %p81 = scmp.eq.s32.totalorder %s26, 1
      %p82 = por %p80, %p81
      %p84 = scmp.ne.s32.totalorder %s69, %s83
      %p85 = scmp.eq.s32.totalorder %s26, 0
      %p86 = por %p84, %p85
      %s88 = sadd.s32 %s87, 1
      %p91 = scmp.eq.s32.totalorder %s20, 1
      %p92 = scmp.ne.s32.totalorder %s87, %s89
      %p93 = scmp.eq.s32.totalorder %s20, 0
      %p94 = por %p92, %p93
      %p95 = scmp.ne.s32.totalorder %s87, %s89
      %p96 = scmp.eq.s32.totalorder %s25, 1
      %p97 = por %p95, %p96
      %p98 = scmp.ne.s32.totalorder %s89, %s90
      %p99 = scmp.eq.s32.totalorder %s25, 0
      %p100 = por %p98, %p99
      %p101 = scmp.ne.s32.totalorder %s89, %s90
      %p102 = scmp.eq.s32.totalorder %s26, 1
      %p103 = por %p101, %p102
      %p105 = scmp.ne.s32.totalorder %s90, %s104
      %p106 = scmp.eq.s32.totalorder %s26, 0
      %p107 = por %p105, %p106
      %s109 = sadd.s32 %s108, 1
      %p112 = scmp.eq.s32.totalorder %s20, 1
      %p113 = scmp.ne.s32.totalorder %s108, %s110
      %p114 = scmp.eq.s32.totalorder %s20, 0
      %p115 = por %p113, %p114
      %p116 = scmp.ne.s32.totalorder %s108, %s110
      %p117 = scmp.eq.s32.totalorder %s25, 1
      %p118 = por %p116, %p117
      %p119 = scmp.ne.s32.totalorder %s110, %s111
      %p120 = scmp.eq.s32.totalorder %s25, 0
      %p121 = por %p119, %p120
      %p122 = scmp.ne.s32.totalorder %s110, %s111
      %p123 = scmp.eq.s32.totalorder %s26, 1
      %p124 = por %p122, %p123
      %p126 = scmp.ne.s32.totalorder %s111, %s125
      %p127 = scmp.eq.s32.totalorder %s26, 0
      %p128 = por %p126, %p127
      %s130 = sadd.s32 %s129, 1
      %p133 = scmp.eq.s32.totalorder %s20, 1
      %p134 = scmp.ne.s32.totalorder %s129, %s131
      %p135 = scmp.eq.s32.totalorder %s20, 0
      %p136 = por %p134, %p135
      %p137 = scmp.ne.s32.totalorder %s129, %s131
      %p138 = scmp.eq.s32.totalorder %s25, 1
      %p139 = por %p137, %p138
      %p140 = scmp.ne.s32.totalorder %s131, %s132
      %p141 = scmp.eq.s32.totalorder %s25, 0
      %p142 = por %p140, %p141
      %p143 = scmp.ne.s32.totalorder %s131, %s132
      %p144 = scmp.eq.s32.totalorder %s26, 1
      %p145 = por %p143, %p144
      %p147 = scmp.ne.s32.totalorder %s132, %s146
      %p148 = scmp.eq.s32.totalorder %s26, 0
      %p149 = por %p147, %p148
      %s151 = sadd.s32 %s150, 1
      %p154 = scmp.eq.s32.totalorder %s20, 1
      %p155 = scmp.ne.s32.totalorder %s150, %s152
      %p156 = scmp.eq.s32.totalorder %s20, 0
      %p157 = por %p155, %p156
      %p158 = scmp.ne.s32.totalorder %s150, %s152
      %p159 = scmp.eq.s32.totalorder %s25, 1
      %p160 = por %p158, %p159
      %p161 = scmp.ne.s32.totalorder %s152, %s153
      %p162 = scmp.eq.s32.totalorder %s25, 0
      %p163 = por %p161, %p162
      %p164 = scmp.ne.s32.totalorder %s152, %s153
      %p165 = scmp.eq.s32.totalorder %s26, 1
      %p166 = por %p164, %p165
      %p168 = scmp.ne.s32.totalorder %s153, %s167
      %p169 = scmp.eq.s32.totalorder %s26, 0
      %p170 = por %p168, %p169
      %s172 = sadd.s32 %s171, 1
      %p175 = scmp.eq.s32.totalorder %s20, 1
      %p176 = scmp.ne.s32.totalorder %s171, %s173
      %p177 = scmp.eq.s32.totalorder %s20, 0
      %p178 = por %p176, %p177
      %p179 = scmp.ne.s32.totalorder %s171, %s173
      %p180 = scmp.eq.s32.totalorder %s25, 1
      %p181 = por %p179, %p180
      %p182 = scmp.ne.s32.totalorder %s173, %s174
      %p183 = scmp.eq.s32.totalorder %s25, 0
      %p184 = por %p182, %p183
      %p185 = scmp.ne.s32.totalorder %s173, %s174
      %p186 = scmp.eq.s32.totalorder %s26, 1
      %p187 = por %p185, %p186
      %p189 = scmp.ne.s32.totalorder %s174, %s188
      %p190 = scmp.eq.s32.totalorder %s26, 0
      %p191 = por %p189, %p190
      %s193 = sadd.s32 %s192, 1
      %p196 = scmp.eq.s32.totalorder %s20, 1
      %p197 = scmp.ne.s32.totalorder %s192, %s194
      %p198 = scmp.eq.s32.totalorder %s20, 0
      %p199 = por %p197, %p198
      %p200 = scmp.ne.s32.totalorder %s192, %s194
      %p201 = scmp.eq.s32.totalorder %s25, 1
      %p202 = por %p200, %p201
      %p203 = scmp.ne.s32.totalorder %s194, %s195
      %p204 = scmp.eq.s32.totalorder %s25, 0
      %p205 = por %p203, %p204
      %p206 = scmp.ne.s32.totalorder %s194, %s195
      %p207 = scmp.eq.s32.totalorder %s26, 1
      %p208 = por %p206, %p207
      %p210 = scmp.ne.s32.totalorder %s195, %s209
      %p211 = scmp.eq.s32.totalorder %s26, 0
      %p212 = por %p210, %p211
      %s214 = sadd.s32 %s213, 1
      %p217 = scmp.eq.s32.totalorder %s20, 1
      %p218 = scmp.ne.s32.totalorder %s213, %s215
      %p219 = scmp.eq.s32.totalorder %s20, 0
      %p220 = por %p218, %p219
      %p221 = scmp.ne.s32.totalorder %s213, %s215
      %p222 = scmp.eq.s32.totalorder %s25, 1
      %p223 = por %p221, %p222
      %p224 = scmp.ne.s32.totalorder %s215, %s216
      %p225 = scmp.eq.s32.totalorder %s25, 0
      %p226 = por %p224, %p225
      %p227 = scmp.ne.s32.totalorder %s215, %s216
      %p228 = scmp.eq.s32.totalorder %s26, 1
      %p229 = por %p227, %p228
      %p231 = scmp.ne.s32.totalorder %s216, %s230
      %p232 = scmp.eq.s32.totalorder %s26, 0
      %p233 = por %p231, %p232
      %s234 = ssub.s32 %s27, %s39
      %p235 = scmp.eq.s32.totalorder %s234, 0
      %s237 = sadd.s32 %s236, 1
      %s238 = scalar_select %p235, %s236, %s237
      %p241 = pneg %p235
      %p242 = scmp.eq.s32.totalorder %s20, 1
      %p243 = por %p241, %p242
      %p244 = scmp.ne.s32.totalorder %s236, %s239
      %p245 = scmp.eq.s32.totalorder %s20, 0
      %p246 = por %p244, %p245
      %p247 = scmp.ne.s32.totalorder %s236, %s239
      %p248 = scmp.eq.s32.totalorder %s25, 1
      %p249 = por %p247, %p248
      %p250 = scmp.ne.s32.totalorder %s239, %s240
      %p251 = scmp.eq.s32.totalorder %s25, 0
      %p252 = por %p250, %p251
      %p253 = scmp.ne.s32.totalorder %s239, %s240
      %p254 = scmp.eq.s32.totalorder %s26, 1
      %p255 = por %p253, %p254
      %p257 = scmp.ne.s32.totalorder %s240, %s256
      %p258 = scmp.eq.s32.totalorder %s26, 0
      %p259 = por %p257, %p258
      %p260 = scmp.le.s32.totalorder 1, %s20
      %p261 = scmp.lt.s32.totalorder %s20, 3
      %p262 = pnand %p260, %p261
      %p263 = pneg %p262
      // Predicated region
      $region9: #{tpu_custom_call.1} parent=5 // pred_check
        _
      $region10: #{tpu_custom_call.1} parent=5 // pred_check_branch
        %265 = sbr.rel (%p262) target = $region12
      $region11: #{tpu_custom_call.1} parent=5 // pred_region
        %s266 = ssub.s32 %s20, 1
        // Predicated region
        $region13: #{tpu_custom_call.1} parent=11 // pred_check
          %p267 = pneg %p58
        $region14: #{tpu_custom_call.1} parent=11 // pred_check_branch
          %269 = sbr.rel (%p267) target = $region16
        $region15: #{tpu_custom_call.1} parent=11 // pred_region
          %271 = vsyncadd [#allocation4], 0
          %s272 = smul.addr %s29, 8
          %s273 = scalar_lea.hbm %s0, %s272
          %s275 = sshll.u32 %s273, 4
          %s276 = int_to_ptr.hbm [resolvable:$true] %s275
          %s277 = sshll.u32 [#allocation3], 4
          %s278 = int_to_ptr.vmem [resolvable:$true] %s277
          %280 = dma.hbm_to_vmem [thread:$0]  %s276, 128, %s278, [#allocation4]
        $region16: #{tpu_custom_call.1} parent=11 // pred_fallthru
          _
        // Predicated region
        $region17: #{tpu_custom_call.1} parent=11 // pred_check
          %p281 = pneg %p79
        $region18: #{tpu_custom_call.1} parent=11 // pred_check_branch
          %283 = sbr.rel (%p281) target = $region20
        $region19: #{tpu_custom_call.1} parent=11 // pred_region
          %285 = vsyncadd [#allocation7], 0
          %s286 = sshll.u32 %s1, 4
          %s287 = int_to_ptr.hbm [resolvable:$true] %s286
          %s288 = sshll.u32 [#allocation6], 4
          %s289 = int_to_ptr.vmem [resolvable:$true] %s288
          %294 = dma.hbm_to_vmem [thread:$0]  %s287, 1024, %s289, [#allocation7], 64, 64, 4
        $region20: #{tpu_custom_call.1} parent=11 // pred_fallthru
          _
        // Predicated region
        $region21: #{tpu_custom_call.1} parent=11 // pred_check
          %p295 = pneg %p100
        $region22: #{tpu_custom_call.1} parent=11 // pred_check_branch
          %297 = sbr.rel (%p295) target = $region24
        $region23: #{tpu_custom_call.1} parent=11 // pred_region
          %299 = vsyncadd [#allocation7], 0
          %s301 = sshll.u32 %s2, 4
          %s302 = int_to_ptr.hbm [resolvable:$true] %s301
          %s303 = sshll.u32 [#allocation8], 4
          %s304 = int_to_ptr.vmem [resolvable:$true] %s303
          %306 = dma.hbm_to_vmem [thread:$0]  %s302, 16, %s304, [#allocation7]
        $region24: #{tpu_custom_call.1} parent=11 // pred_fallthru
          _
        // Predicated region
        $region25: #{tpu_custom_call.1} parent=11 // pred_check
          %p307 = pneg %p121
        $region26: #{tpu_custom_call.1} parent=11 // pred_check_branch
          %309 = sbr.rel (%p307) target = $region28
        $region27: #{tpu_custom_call.1} parent=11 // pred_region
          %311 = vsyncadd [#allocation10], 0
          %s312 = sshll.u32 %s3, 4
          %s313 = int_to_ptr.hbm [resolvable:$true] %s312
          %s314 = sshll.u32 [#allocation9], 4
          %s315 = int_to_ptr.vmem [resolvable:$true] %s314
          %320 = dma.hbm_to_vmem [thread:$0]  %s313, 2048, %s315, [#allocation10], 64, 64, 4
        $region28: #{tpu_custom_call.1} parent=11 // pred_fallthru
          _
        // Predicated region
        $region29: #{tpu_custom_call.1} parent=11 // pred_check
          %p321 = pneg %p142
        $region30: #{tpu_custom_call.1} parent=11 // pred_check_branch
          %323 = sbr.rel (%p321) target = $region32
        $region31: #{tpu_custom_call.1} parent=11 // pred_region
          _
        $region32: #{tpu_custom_call.1} parent=11 // pred_fallthru
          _
        // Predicated region
        $region33: #{tpu_custom_call.1} parent=11 // pred_check
          %p324 = pneg %p163
        $region34: #{tpu_custom_call.1} parent=11 // pred_check_branch
          %326 = sbr.rel (%p324) target = $region36
        $region35: #{tpu_custom_call.1} parent=11 // pred_region
          %328 = vsyncadd [#allocation10], 0
          %s329 = sshll.u32 %s5, 4
          %s330 = int_to_ptr.hbm [resolvable:$true] %s329
          %s331 = sshll.u32 [#allocation11], 4
          %s332 = int_to_ptr.vmem [resolvable:$true] %s331
          %337 = dma.hbm_to_vmem [thread:$0]  %s330, 2048, %s332, [#allocation10], 64, 64, 4
        $region36: #{tpu_custom_call.1} parent=11 // pred_fallthru
          _
        // Predicated region
        $region37: #{tpu_custom_call.1} parent=11 // pred_check
          %p338 = pneg %p184
        $region38: #{tpu_custom_call.1} parent=11 // pred_check_branch
          %340 = sbr.rel (%p338) target = $region40
        $region39: #{tpu_custom_call.1} parent=11 // pred_region
          _
        $region40: #{tpu_custom_call.1} parent=11 // pred_fallthru
          _
        // Predicated region
        $region41: #{tpu_custom_call.1} parent=11 // pred_check
          %p341 = pneg %p205
        $region42: #{tpu_custom_call.1} parent=11 // pred_check_branch
          %343 = sbr.rel (%p341) target = $region44
        $region43: #{tpu_custom_call.1} parent=11 // pred_region
          %345 = vsyncadd [#allocation13], 0
          %s346 = sshll.u32 %s7, 4
          %s347 = int_to_ptr.hbm [resolvable:$true] %s346
          %s348 = sshll.u32 [#allocation12], 4
          %s349 = int_to_ptr.vmem [resolvable:$true] %s348
          %354 = dma.hbm_to_vmem [thread:$0]  %s347, 1024, %s349, [#allocation13], 64, 64, 4
        $region44: #{tpu_custom_call.1} parent=11 // pred_fallthru
          _
        // Predicated region
        $region45: #{tpu_custom_call.1} parent=11 // pred_check
          %p355 = pneg %p226
        $region46: #{tpu_custom_call.1} parent=11 // pred_check_branch
          %357 = sbr.rel (%p355) target = $region48
        $region47: #{tpu_custom_call.1} parent=11 // pred_region
          _
        $region48: #{tpu_custom_call.1} parent=11 // pred_fallthru
          _
      $region12: #{tpu_custom_call.1} parent=5 // pred_fallthru
        _
      %p358 = scmp.lt.s32.totalorder %s20, 2
      // Predicated region
      $region49: #{tpu_custom_call.1} parent=5 // pred_check
        %p359 = pneg %p358
      $region50: #{tpu_custom_call.1} parent=5 // pred_check_branch
        %361 = sbr.rel (%p359) target = $region52
      $region51: #{tpu_custom_call.1} parent=5 // pred_region
        _
      $region52: #{tpu_custom_call.1} parent=5 // pred_fallthru
        _
      %p362 = scmp.le.s32.totalorder 1, %s20
      %p363 = scmp.lt.s32.totalorder %s20, 3
      %p364 = pnand %p362, %p363
      %p365 = pneg %p364
      // Predicated region
      $region53: #{tpu_custom_call.1} parent=5 // pred_check
        _
      $region54: #{tpu_custom_call.1} parent=5 // pred_check_branch
        %367 = sbr.rel (%p364) target = $region56
      $region55: #{tpu_custom_call.1} parent=5 // pred_region
        %s368 = ssub.s32 %s20, 1
        // Predicated region
        $region57: #{tpu_custom_call.1} parent=55 // pred_check
          %p369 = pneg %p58
        $region58: #{tpu_custom_call.1} parent=55 // pred_check_branch
          %371 = sbr.rel (%p369) target = $region60
        $region59: #{tpu_custom_call.1} parent=55 // pred_region
          %373 = dma.done [#allocation4], 128
        $region60: #{tpu_custom_call.1} parent=55 // pred_fallthru
          _
        // Predicated region
        $region61: #{tpu_custom_call.1} parent=55 // pred_check
          %p374 = pneg %p79
        $region62: #{tpu_custom_call.1} parent=55 // pred_check_branch
          %376 = sbr.rel (%p374) target = $region64
        $region63: #{tpu_custom_call.1} parent=55 // pred_region
          %378 = dma.done [#allocation7], 1024
        $region64: #{tpu_custom_call.1} parent=55 // pred_fallthru
          _
        // Predicated region
        $region65: #{tpu_custom_call.1} parent=55 // pred_check
          %p379 = pneg %p100
        $region66: #{tpu_custom_call.1} parent=55 // pred_check_branch
          %381 = sbr.rel (%p379) target = $region68
        $region67: #{tpu_custom_call.1} parent=55 // pred_region
          %383 = dma.done [#allocation7], 16
        $region68: #{tpu_custom_call.1} parent=55 // pred_fallthru
          _
        // Predicated region
        $region69: #{tpu_custom_call.1} parent=55 // pred_check
          %p384 = pneg %p121
        $region70: #{tpu_custom_call.1} parent=55 // pred_check_branch
          %386 = sbr.rel (%p384) target = $region72
        $region71: #{tpu_custom_call.1} parent=55 // pred_region
          %388 = dma.done [#allocation10], 2048
        $region72: #{tpu_custom_call.1} parent=55 // pred_fallthru
          _
        // Predicated region
        $region73: #{tpu_custom_call.1} parent=55 // pred_check
          %p389 = pneg %p163
        $region74: #{tpu_custom_call.1} parent=55 // pred_check_branch
          %391 = sbr.rel (%p389) target = $region76
        $region75: #{tpu_custom_call.1} parent=55 // pred_region
          %393 = dma.done [#allocation10], 2048
        $region76: #{tpu_custom_call.1} parent=55 // pred_fallthru
          _
        // Predicated region
        $region77: #{tpu_custom_call.1} parent=55 // pred_check
          %p394 = pneg %p205
        $region78: #{tpu_custom_call.1} parent=55 // pred_check_branch
          %396 = sbr.rel (%p394) target = $region80
        $region79: #{tpu_custom_call.1} parent=55 // pred_region
          %398 = dma.done [#allocation13], 1024
        $region80: #{tpu_custom_call.1} parent=55 // pred_fallthru
          _
        %p399 = pneg %p58
        %p400 = pneg %p55
        %p401 = pneg %p79
        %p402 = pneg %p76
        %p403 = pneg %p100
        %p404 = pneg %p97
        %p405 = pneg %p121
        %p406 = pneg %p118
        %p407 = pneg %p142
        %p408 = pneg %p139
        %p409 = pneg %p163
        %p410 = pneg %p160
        %p411 = pneg %p184
        %p412 = pneg %p181
        %p413 = pneg %p205
        %p414 = pneg %p202
        %p415 = pneg %p226
        %p416 = pneg %p223
        %p417 = pneg %p252
        %p418 = pneg %p249
        %p419 = scmp.eq.s32.totalorder %s30, 0
        // Predicated region
        $region81: #{tpu_custom_call.1} parent=55 // pred_check
          %p420 = pneg %p419
        $region82: #{tpu_custom_call.1} parent=55 // pred_check_branch
          %422 = sbr.rel (%p420) target = $region84
        $region83: #{tpu_custom_call.1} parent=55 // pred_region
          %v423 = vld [vmem:[#allocation3] sm:$0xff]
          %v424 = vpack.c.bf16 %v423, %v423
          %v425 = vld [vmem:[#allocation6] sm:$0xf]
          %v426 = vld [vmem:[#allocation6 + $0x4] sm:$0xf]
          %v427 = vld [vmem:[#allocation6 + $0x8] sm:$0xf]
          %v428 = vld [vmem:[#allocation6 + $0xc] sm:$0xf]
          %v429 = vld [vmem:[#allocation6 + $0x10] sm:$0xf]
          %v430 = vld [vmem:[#allocation6 + $0x14] sm:$0xf]
          %v431 = vld [vmem:[#allocation6 + $0x18] sm:$0xf]
          %v432 = vld [vmem:[#allocation6 + $0x1c] sm:$0xf]
          %v433 = vld [vmem:[#allocation6 + $0x20] sm:$0xf]
          %v434 = vld [vmem:[#allocation6 + $0x24] sm:$0xf]
          %v435 = vld [vmem:[#allocation6 + $0x28] sm:$0xf]
          %v436 = vld [vmem:[#allocation6 + $0x2c] sm:$0xf]
          %v437 = vld [vmem:[#allocation6 + $0x30] sm:$0xf]
          %v438 = vld [vmem:[#allocation6 + $0x34] sm:$0xf]
          %v439 = vld [vmem:[#allocation6 + $0x38] sm:$0xf]
          %v440 = vld [vmem:[#allocation6 + $0x3c] sm:$0xf]
          %v441 = vld [vmem:[#allocation8] sm:$0x1]
          %v443 = vperm.slane %v441, 0
          %v461 = vunpack.c.l.b16 %v425
          %v462 = vunpack.c.l.b16 %v426
          %v463 = vunpack.c.l.b16 %v427
          %v464 = vunpack.c.l.b16 %v428
          %v465 = vunpack.c.l.b16 %v429
          %v466 = vunpack.c.l.b16 %v430
          %v467 = vunpack.c.l.b16 %v431
          %v468 = vunpack.c.l.b16 %v432
          %v469 = vunpack.c.l.b16 %v433
          %v470 = vunpack.c.l.b16 %v434
          %v471 = vunpack.c.l.b16 %v435
          %v472 = vunpack.c.l.b16 %v436
          %v473 = vunpack.c.l.b16 %v437
          %v474 = vunpack.c.l.b16 %v438
          %v475 = vunpack.c.l.b16 %v439
          %v476 = vunpack.c.l.b16 %v440
          %v477 = vpack.c.b16 %v462, %v461
          %v478 = vpack.c.b16 %v464, %v463
          %v479 = vpack.c.b16 %v466, %v465
          %v480 = vpack.c.b16 %v468, %v467
          %v481 = vpack.c.b16 %v470, %v469
          %v482 = vpack.c.b16 %v472, %v471
          %v483 = vpack.c.b16 %v474, %v473
          %v484 = vpack.c.b16 %v476, %v475
          %493 = vmatpush.bf16.msra.mxu0 %v484
          %494 = vmatpush.bf16.msra.mxu0 %v483
          %495 = vmatpush.bf16.msra.mxu0 %v482
          %496 = vmatpush.bf16.msra.mxu0 %v481
          %497 = vmatpush.bf16.msra.mxu0 %v480
          %498 = vmatpush.bf16.msra.mxu0 %v479
          %499 = vmatpush.bf16.msra.mxu0 %v478
          %500 = vmatpush.bf16.msra.mxu0 %v477
          %501 = vmatmul.bf16.gmra.mxu0 %v424
          %v502 = vpop.f32.mrf.mxu0
          %v503 = vadd.f32 %v443, %v502
          %v504 = vpop.f32.mrf.mxu0
          %505 = vdwg.mxu0
          %v506 = vtanh.pop %v503
          %507 = vst [vmem:[#allocation2] sm:$0xff] %v506
        $region84: #{tpu_custom_call.1} parent=55 // pred_fallthru
          _
        %v508 = vld [vmem:[#allocation2] sm:$0xff]
        %v509 = vpack.c.bf16 %v508, %v508
        %s510 = smul.u32 %s30, 16
        %s511 = smul.addr %s510, 4
        %s512 = scalar_lea.vmem [#allocation9], %s511
        %v513 = vld [vmem:[%s512] sm:$0xf]
        %v514 = vld [vmem:[%s512 + $0x4] sm:$0xf]
        %v515 = vld [vmem:[%s512 + $0x8] sm:$0xf]
        %v516 = vld [vmem:[%s512 + $0xc] sm:$0xf]
        %v517 = vld [vmem:[%s512 + $0x10] sm:$0xf]
        %v518 = vld [vmem:[%s512 + $0x14] sm:$0xf]
        %v519 = vld [vmem:[%s512 + $0x18] sm:$0xf]
        %v520 = vld [vmem:[%s512 + $0x1c] sm:$0xf]
        %v521 = vld [vmem:[%s512 + $0x20] sm:$0xf]
        %v522 = vld [vmem:[%s512 + $0x24] sm:$0xf]
        %v523 = vld [vmem:[%s512 + $0x28] sm:$0xf]
        %v524 = vld [vmem:[%s512 + $0x2c] sm:$0xf]
        %v525 = vld [vmem:[%s512 + $0x30] sm:$0xf]
        %v526 = vld [vmem:[%s512 + $0x34] sm:$0xf]
        %v527 = vld [vmem:[%s512 + $0x38] sm:$0xf]
        %v528 = vld [vmem:[%s512 + $0x3c] sm:$0xf]
        %s529 = scalar_lea.vmem %s4, %s30
        %v530 = vld [vmem:[%s529] sm:$0x1]
        %v532 = vperm.slane %v530, 0
        %v550 = vunpack.c.l.b16 %v513
        %v551 = vunpack.c.l.b16 %v514
        %v552 = vunpack.c.l.b16 %v515
        %v553 = vunpack.c.l.b16 %v516
        %v554 = vunpack.c.l.b16 %v517
        %v555 = vunpack.c.l.b16 %v518
        %v556 = vunpack.c.l.b16 %v519
        %v557 = vunpack.c.l.b16 %v520
        %v558 = vunpack.c.l.b16 %v521
        %v559 = vunpack.c.l.b16 %v522
        %v560 = vunpack.c.l.b16 %v523
        %v561 = vunpack.c.l.b16 %v524
        %v562 = vunpack.c.l.b16 %v525
        %v563 = vunpack.c.l.b16 %v526
        %v564 = vunpack.c.l.b16 %v527
        %v565 = vunpack.c.l.b16 %v528
        %v566 = vpack.c.b16 %v551, %v550
        %v567 = vpack.c.b16 %v553, %v552
        %v568 = vpack.c.b16 %v555, %v554
        %v569 = vpack.c.b16 %v557, %v556
        %v570 = vpack.c.b16 %v559, %v558
        %v571 = vpack.c.b16 %v561, %v560
        %v572 = vpack.c.b16 %v563, %v562
        %v573 = vpack.c.b16 %v565, %v564
        %582 = vmatpush.bf16.msra.mxu0 %v573
        %583 = vmatpush.bf16.msra.mxu0 %v572
        %584 = vmatpush.bf16.msra.mxu0 %v571
        %585 = vmatpush.bf16.msra.mxu0 %v570
        %586 = vmatpush.bf16.msra.mxu0 %v569
        %587 = vmatpush.bf16.msra.mxu0 %v568
        %588 = vmatpush.bf16.msra.mxu0 %v567
        %589 = vmatpush.bf16.msra.mxu0 %v566
        %590 = vmatmul.bf16.gmra.mxu0 %v509
        %v591 = vpop.f32.mrf.mxu0
        %v592 = vadd.f32 %v532, %v591
        %v593 = vpop.f32.mrf.mxu0
        %594 = vdwg.mxu0
        %vm595 = vcmp.gt.f32.partialorder %v592, 0.0
        %v596 = vmul.f32 %v592, 0.2
        %v597 = vsel %vm595, %v592, %v596
        %v598 = vpack.c.bf16 %v597, %v597
        %s599 = smul.addr %s510, 4
        %s600 = scalar_lea.vmem [#allocation11], %s599
        %v601 = vld [vmem:[%s600] sm:$0xf]
        %v602 = vld [vmem:[%s600 + $0x4] sm:$0xf]
        %v603 = vld [vmem:[%s600 + $0x8] sm:$0xf]
        %v604 = vld [vmem:[%s600 + $0xc] sm:$0xf]
        %v605 = vld [vmem:[%s600 + $0x10] sm:$0xf]
        %v606 = vld [vmem:[%s600 + $0x14] sm:$0xf]
        %v607 = vld [vmem:[%s600 + $0x18] sm:$0xf]
        %v608 = vld [vmem:[%s600 + $0x1c] sm:$0xf]
        %v609 = vld [vmem:[%s600 + $0x20] sm:$0xf]
        %v610 = vld [vmem:[%s600 + $0x24] sm:$0xf]
        %v611 = vld [vmem:[%s600 + $0x28] sm:$0xf]
        %v612 = vld [vmem:[%s600 + $0x2c] sm:$0xf]
        %v613 = vld [vmem:[%s600 + $0x30] sm:$0xf]
        %v614 = vld [vmem:[%s600 + $0x34] sm:$0xf]
        %v615 = vld [vmem:[%s600 + $0x38] sm:$0xf]
        %v616 = vld [vmem:[%s600 + $0x3c] sm:$0xf]
        %s617 = scalar_lea.vmem %s6, %s30
        %v618 = vld [vmem:[%s617] sm:$0x1]
        %v620 = vperm.slane %v618, 0
        %v638 = vunpack.c.l.b16 %v601
        %v639 = vunpack.c.l.b16 %v602
        %v640 = vunpack.c.l.b16 %v603
        %v641 = vunpack.c.l.b16 %v604
        %v642 = vunpack.c.l.b16 %v605
        %v643 = vunpack.c.l.b16 %v606
        %v644 = vunpack.c.l.b16 %v607
        %v645 = vunpack.c.l.b16 %v608
        %v646 = vunpack.c.l.b16 %v609
        %v647 = vunpack.c.l.b16 %v610
        %v648 = vunpack.c.l.b16 %v611
        %v649 = vunpack.c.l.b16 %v612
        %v650 = vunpack.c.l.b16 %v613
        %v651 = vunpack.c.l.b16 %v614
        %v652 = vunpack.c.l.b16 %v615
        %v653 = vunpack.c.l.b16 %v616
        %v654 = vpack.c.b16 %v639, %v638
        %v655 = vpack.c.b16 %v641, %v640
        %v656 = vpack.c.b16 %v643, %v642
        %v657 = vpack.c.b16 %v645, %v644
        %v658 = vpack.c.b16 %v647, %v646
        %v659 = vpack.c.b16 %v649, %v648
        %v660 = vpack.c.b16 %v651, %v650
        %v661 = vpack.c.b16 %v653, %v652
        %670 = vmatpush.bf16.msra.mxu0 %v661
        %671 = vmatpush.bf16.msra.mxu0 %v660
        %672 = vmatpush.bf16.msra.mxu0 %v659
        %673 = vmatpush.bf16.msra.mxu0 %v658
        %674 = vmatpush.bf16.msra.mxu0 %v657
        %675 = vmatpush.bf16.msra.mxu0 %v656
        %676 = vmatpush.bf16.msra.mxu0 %v655
        %677 = vmatpush.bf16.msra.mxu0 %v654
        %678 = vmatmul.bf16.gmra.mxu0 %v598
        %v679 = vpop.f32.mrf.mxu0
        %v680 = vadd.f32 %v620, %v679
        %v681 = vpop.f32.mrf.mxu0
        %682 = vdwg.mxu0
        %v683 = vadd.f32 %v680, %v508
        %vm684 = vcmp.gt.f32.partialorder %v683, 0.0
        %v685 = vmul.f32 %v683, 0.2
        %v686 = vsel %vm684, %v683, %v685
        %687 = vst [vmem:[#allocation2] sm:$0xff] %v686
        %p688 = scmp.eq.s32.totalorder %s30, 1
        // Predicated region
        $region85: #{tpu_custom_call.1} parent=55 // pred_check
          %p689 = pneg %p688
        $region86: #{tpu_custom_call.1} parent=55 // pred_check_branch
          %691 = sbr.rel (%p689) target = $region88
        $region87: #{tpu_custom_call.1} parent=55 // pred_region
          %v692 = vpack.c.bf16 %v686, %v686
          %v693 = vld [vmem:[#allocation12] sm:$0xf]
          %v694 = vld [vmem:[#allocation12 + $0x4] sm:$0xf]
          %v695 = vld [vmem:[#allocation12 + $0x8] sm:$0xf]
          %v696 = vld [vmem:[#allocation12 + $0xc] sm:$0xf]
          %v697 = vld [vmem:[#allocation12 + $0x10] sm:$0xf]
          %v698 = vld [vmem:[#allocation12 + $0x14] sm:$0xf]
          %v699 = vld [vmem:[#allocation12 + $0x18] sm:$0xf]
          %v700 = vld [vmem:[#allocation12 + $0x1c] sm:$0xf]
          %v701 = vld [vmem:[#allocation12 + $0x20] sm:$0xf]
          %v702 = vld [vmem:[#allocation12 + $0x24] sm:$0xf]
          %v703 = vld [vmem:[#allocation12 + $0x28] sm:$0xf]
          %v704 = vld [vmem:[#allocation12 + $0x2c] sm:$0xf]
          %v705 = vld [vmem:[#allocation12 + $0x30] sm:$0xf]
          %v706 = vld [vmem:[#allocation12 + $0x34] sm:$0xf]
          %v707 = vld [vmem:[#allocation12 + $0x38] sm:$0xf]
          %v708 = vld [vmem:[#allocation12 + $0x3c] sm:$0xf]
          %v709 = vld [vmem:[%s8] sm:$0x1]
          %v711 = vperm.slane %v709, 0
          %v729 = vunpack.c.l.b16 %v693
          %v730 = vunpack.c.l.b16 %v694
          %v731 = vunpack.c.l.b16 %v695
          %v732 = vunpack.c.l.b16 %v696
          %v733 = vunpack.c.l.b16 %v697
          %v734 = vunpack.c.l.b16 %v698
          %v735 = vunpack.c.l.b16 %v699
          %v736 = vunpack.c.l.b16 %v700
          %v737 = vunpack.c.l.b16 %v701
          %v738 = vunpack.c.l.b16 %v702
          %v739 = vunpack.c.l.b16 %v703
          %v740 = vunpack.c.l.b16 %v704
          %v741 = vunpack.c.l.b16 %v705
          %v742 = vunpack.c.l.b16 %v706
          %v743 = vunpack.c.l.b16 %v707
          %v744 = vunpack.c.l.b16 %v708
          %v745 = vpack.c.b16 %v730, %v729
          %v746 = vpack.c.b16 %v732, %v731
          %v747 = vpack.c.b16 %v734, %v733
          %v748 = vpack.c.b16 %v736, %v735
          %v749 = vpack.c.b16 %v738, %v737
          %v750 = vpack.c.b16 %v740, %v739
          %v751 = vpack.c.b16 %v742, %v741
          %v752 = vpack.c.b16 %v744, %v743
          %761 = vmatpush.bf16.msra.mxu0 %v752
          %762 = vmatpush.bf16.msra.mxu0 %v751
          %763 = vmatpush.bf16.msra.mxu0 %v750
          %764 = vmatpush.bf16.msra.mxu0 %v749
          %765 = vmatpush.bf16.msra.mxu0 %v748
          %766 = vmatpush.bf16.msra.mxu0 %v747
          %767 = vmatpush.bf16.msra.mxu0 %v746
          %768 = vmatpush.bf16.msra.mxu0 %v745
          %769 = vmatmul.bf16.gmra.mxu0 %v692
          %v770 = vpop.f32.mrf.mxu0
          %v771 = vadd.f32 %v711, %v770
          %v772 = vpop.f32.mrf.mxu0
          %773 = vdwg.mxu0
          %774 = vst [vmem:[#allocation14] sm:$0xff] %v771
        $region88: #{tpu_custom_call.1} parent=55 // pred_fallthru
          _
        // Predicated region
        $region89: #{tpu_custom_call.1} parent=55 // pred_check
          %p775 = pneg %p249
        $region90: #{tpu_custom_call.1} parent=55 // pred_check_branch
          %777 = sbr.rel (%p775) target = $region92
        $region91: #{tpu_custom_call.1} parent=55 // pred_region
          %779 = vsyncadd [#allocation5], 0
          %s780 = smul.addr %s29, 8
          %s781 = scalar_lea.hbm %s9, %s780
          %s783 = sshll.u32 [#allocation14], 4
          %s784 = int_to_ptr.vmem [resolvable:$true] %s783
          %s785 = sshll.u32 %s781, 4
          %s786 = int_to_ptr.hbm [resolvable:$true] %s785
          %788 = dma.vmem_to_hbm [thread:$0]  %s784, 128, %s786, [#allocation5]
        $region92: #{tpu_custom_call.1} parent=55 // pred_fallthru
          _
        // Predicated region
        $region93: #{tpu_custom_call.1} parent=55 // pred_check
          %p789 = pneg %p249
        $region94: #{tpu_custom_call.1} parent=55 // pred_check_branch
          %791 = sbr.rel (%p789) target = $region96
        $region95: #{tpu_custom_call.1} parent=55 // pred_region
          %793 = dma.done [#allocation5], 128
        $region96: #{tpu_custom_call.1} parent=55 // pred_fallthru
          _
      $region56: #{tpu_custom_call.1} parent=5 // pred_fallthru
        _
      %p794 = scmp.le.s32.totalorder 2, %s20
      // Predicated region
      $region97: #{tpu_custom_call.1} parent=5 // pred_check
        %p795 = pneg %p794
      $region98: #{tpu_custom_call.1} parent=5 // pred_check_branch
        %797 = sbr.rel (%p795) target = $region100
      $region99: #{tpu_custom_call.1} parent=5 // pred_region
        %s798 = ssub.s32 %s20, 2
      $region100: #{tpu_custom_call.1} parent=5 // pred_fallthru
        _
    $region6: #{tpu_custom_call.1} parent=1 // loop_footer
      %s24 = sadd.s32 1, %s20
    $region7: #{tpu_custom_call.1} parent=1 // loop_footer_branch
      %19 = sbr.rel target = $region3
    $region8: #{tpu_custom_call.1} parent=1 // loop_exit
      _
    %799 = vsyncpa [#allocation4], 1
    %s800 = scalar_lea.sflag [#allocation4], 1
    %801 = vsyncpa %s800, 1
    %802 = vsyncpa [#allocation7], 1
    %803 = vsyncpa [#allocation10], 1
    %804 = vsyncpa [#allocation13], 1
    %805 = vsyncpa [#allocation5], 1
    %s806 = scalar_lea.sflag [#allocation5], 1
    %807 = vsyncpa %s806, 1

</llo_original>
